<compile_context>
chip_gen: v7x
topology: tpu7x:2x2x1
jax: 0.10.0
libtpu: 0.0.40
codegen_flags: <defaults>
</compile_context>

<pallas_src>
import functools
import math

import jax
import jax.numpy as jnp
from jax.experimental import pallas as pl
from jax.experimental.pallas import tpu as pltpu


# ----------------------------- kernel --------------------------------------- #

def vicreg_fused_kernel(*refs, num_hidden, batch_size, num_features,
                        sim_coeff, std_coeff, cov_coeff):
    """Whole VICReg forward in one kernel.

    Grid: (k_tiles,).  The heavy first matmul ([2N, Din] @ [Din, emb]) is
    tiled over K with an f32 VMEM accumulator; on the last K step the
    projector (per-branch BatchNorm, training stats) and the full VICReg loss
    run fused in VMEM and only the scalar loss is written out.
    """
    img_ref = refs[0]                          # (2N, tk) bf16
    w0_ref, b0_ref = refs[1], refs[2]          # (tk, emb) bf16, (1, emb) f32
    hidden_refs = refs[3:3 + 4 * num_hidden]   # [W^T, b, gamma, beta] * H
    wlast_ref = refs[3 + 4 * num_hidden]       # (d_prev, D) bf16
    loss_ref = refs[4 + 4 * num_hidden]        # (1, 1) f32 SMEM
    acc_ref = refs[5 + 4 * num_hidden]         # (2N, emb) f32 VMEM scratch

    k = pl.program_id(0)

    @pl.when(k == 0)
    def _():
        acc_ref[...] = jnp.zeros_like(acc_ref)

    # Heavy first matmul: both branches share the M axis (2N rows), so W0 is
    # streamed from HBM exactly once.  bf16 x bf16 operands, f32 accumulation.
    acc_ref[...] += jnp.dot(img_ref[...], w0_ref[...],
                            preferred_element_type=jnp.float32)

    @pl.when(k == pl.num_programs(0) - 1)
    def _():
        n = batch_size

        # Backbone stand-in activation (Linear + ReLU).
        h = jnp.maximum(acc_ref[...] + b0_ref[...], 0.0)       # (2N, emb) f32
        hx = h[:n]                                             # branch x
        hy = h[n:]                                             # branch y

        # Projector: [Linear -> BatchNorm1d(batch stats, per branch) -> ReLU]*H
        # Weights are loaded once from VMEM and reused for both branches
        # (the per-branch matmuls are tiny; the kernel is DMA/overhead bound).
        for i in range(num_hidden):
            wt_ref, b_ref, g_ref, be_ref = hidden_refs[4 * i: 4 * i + 4]
            w = wt_ref[...]
            b = b_ref[...]
            g = g_ref[...]
            be = be_ref[...]

            def _lin_bn_relu(a):
                z = jnp.dot(a.astype(jnp.bfloat16), w,
                            preferred_element_type=jnp.float32) + b
                mu = jnp.mean(z, axis=0, keepdims=True)
                var = jnp.mean(jnp.square(z - mu), axis=0, keepdims=True)
                zh = (z - mu) * jax.lax.rsqrt(var + 1e-5)
                return jnp.maximum(zh * g + be, 0.0)

            hx = _lin_bn_relu(hx)
            hy = _lin_bn_relu(hy)

        # Final projector layer: Linear(bias=False).
        wl = wlast_ref[...]
        x = jnp.dot(hx.astype(jnp.bfloat16), wl,
                    preferred_element_type=jnp.float32)         # (N, D) f32
        y = jnp.dot(hy.astype(jnp.bfloat16), wl,
                    preferred_element_type=jnp.float32)

        # ---------------- VICReg loss (fused; features stay in VMEM) -------
        # representation loss: F.mse_loss(x, y)
        repr_loss = jnp.mean(jnp.square(x - y))

        # center (FullGatherLayer is identity for world_size == 1)
        xc = x - jnp.mean(x, axis=0, keepdims=True)
        yc = y - jnp.mean(y, axis=0, keepdims=True)

        # One sublane sum-of-squares gives both the unbiased variance (std
        # term) and the covariance diagonal (off-diagonal subtraction).
        sumsq_x = jnp.sum(xc * xc, axis=0, keepdims=True)       # (1, D)
        sumsq_y = jnp.sum(yc * yc, axis=0, keepdims=True)

        # NOTE: batch_size == rows per branch here (world_size == 1, no M
        # tiling); if the batch is ever tiled/gathered these must be re-derived
        # with a cross-tile reduction.
        std_x = jnp.sqrt(sumsq_x / (batch_size - 1) + 1e-4)     # torch.var: unbiased
        std_y = jnp.sqrt(sumsq_y / (batch_size - 1) + 1e-4)
        std_loss = (jnp.mean(jnp.maximum(1.0 - std_x, 0.0)) / 2.0
                    + jnp.mean(jnp.maximum(1.0 - std_y, 0.0)) / 2.0)

        # cov = X^T X / (batch_size - 1) without materializing a transpose:
        # contract over the batch (sublane) dim directly (f32 for fidelity).
        dnums = (((0,), (0,)), ((), ()))
        cov_x = jax.lax.dot_general(xc, xc, dnums,
                                    preferred_element_type=jnp.float32)
        cov_y = jax.lax.dot_general(yc, yc, dnums,
                                    preferred_element_type=jnp.float32)
        cov_x = cov_x / (batch_size - 1)
        cov_y = cov_y / (batch_size - 1)

        diag_x = sumsq_x / (batch_size - 1)                     # == diag(cov_x)
        diag_y = sumsq_y / (batch_size - 1)

        # off-diagonal penalty as total - diagonal (no D x D iota / select).
        cov_loss = ((jnp.sum(cov_x * cov_x) - jnp.sum(diag_x * diag_x))
                    / num_features
                    + (jnp.sum(cov_y * cov_y) - jnp.sum(diag_y * diag_y))
                    / num_features)

        loss_ref[0, 0] = (sim_coeff * repr_loss + std_coeff * std_loss
                          + cov_coeff * cov_loss)


# ----------------------------- wrapper -------------------------------------- #

def _estimate_vmem_bytes(n2, tk, emb, params):
    """Resident-set estimate (+ headroom) for vmem_limit_bytes."""
    est = 0
    est += 2 * n2 * tk * 2                 # double-buffered bf16 image tiles
    est += 2 * tk * emb * 2                # double-buffered bf16 W0 tiles
    est += n2 * emb * 4                    # f32 accumulator scratch
    est += 2 * emb * 4                     # b0
    d_out = emb
    for layer in params["hidden"]:
        di, do = layer["wt"].shape
        est += 2 * (di * do * 2 + 3 * do * 4)
        d_out = do
    di, d_out = params["final_wt"].shape
    est += 2 * di * d_out * 2
    # finalize temporaries: activations + D x D covariance matrices
    est += 6 * n2 * max(emb, d_out) * 4 + 2 * d_out * d_out * 4
    est = int(est * 1.25) + (2 << 20)
    # stay well below v7x's 64 MiB physical VMEM per core
    return min(max(est, 4 << 20), 48 << 20)


def pallas_vicreg_forward(flat2d, params, *, batch_size, num_features,
                          sim_coeff, std_coeff, cov_coeff, tk=None):
    """flat2d: [2N, Din] bf16 stacked views -> scalar VICReg loss (one call)."""
    n2, din = flat2d.shape
    if tk is None:
        tk = din            # collapse K tiling: grid-step overhead dominates here
    assert din % tk == 0, "Din must be a multiple of the K tile"

    bb = params["backbone"]
    hidden = params["hidden"]
    w_last = params["final_wt"]
    emb = bb["wt"].shape[1]
    num_hidden = len(hidden)

    in_specs = [
        pl.BlockSpec((n2, tk), lambda k: (0, k)),    # stacked bf16 image views
        pl.BlockSpec((tk, emb), lambda k: (k, 0)),   # W0^T bf16 (K-streamed)
        pl.BlockSpec((1, emb), lambda k: (0, 0)),    # b0 (f32)
    ]
    args = [flat2d, bb["wt"], bb["b"]]
    for layer in hidden:
        di, do = layer["wt"].shape
        in_specs += [
            pl.BlockSpec((di, do), lambda k: (0, 0)),   # W^T (bf16)
            pl.BlockSpec((1, do), lambda k: (0, 0)),    # bias
            pl.BlockSpec((1, do), lambda k: (0, 0)),    # gamma
            pl.BlockSpec((1, do), lambda k: (0, 0)),    # beta
        ]
        args += [layer["wt"], layer["b"], layer["gamma"], layer["beta"]]
    in_specs.append(pl.BlockSpec(w_last.shape, lambda k: (0, 0)))
    args.append(w_last)

    kernel = functools.partial(
        vicreg_fused_kernel, num_hidden=num_hidden, batch_size=batch_size,
        num_features=num_features, sim_coeff=sim_coeff, std_coeff=std_coeff,
        cov_coeff=cov_coeff)

    out = pl.pallas_call(
        kernel,
        out_shape=jax.ShapeDtypeStruct((1, 1), jnp.float32),
        grid=(din // tk,),
        in_specs=in_specs,
        out_specs=pl.BlockSpec(memory_space=pltpu.MemorySpace.SMEM),
        scratch_shapes=[pltpu.VMEM((n2, emb), jnp.float32)],
        compiler_params=pltpu.CompilerParams(
            dimension_semantics=("arbitrary",),
            vmem_limit_bytes=_estimate_vmem_bytes(n2, tk, emb, params)),
    )(*args)
    return out[0, 0]


# --------------------------- parameter setup -------------------------------- #

def init_params(key, in_dim, embedding, mlp):
    """Backbone stand-in + head_projector weights.

    Weights are pre-transposed to [Din, Dout] and stored in bf16 (MXU
    operands); biases / BN affine params stay f32 (VPU path).
    """
    f = list(map(int, f"{embedding}-{mlp}".split('-')))

    key, k1, k2 = jax.random.split(key, 3)
    bound = 1.0 / math.sqrt(in_dim)
    w = jax.random.uniform(k1, (embedding, in_dim), jnp.float32, -bound, bound)
    b = jax.random.uniform(k2, (1, embedding), jnp.float32, -bound, bound)
    backbone = {"wt": w.T.astype(jnp.bfloat16), "b": b}

    hidden = []
    for i in range(len(f) - 2):
        key, k1, k2 = jax.random.split(key, 3)
        bound = 1.0 / math.sqrt(f[i])
        w = jax.random.uniform(k1, (f[i + 1], f[i]), jnp.float32, -bound, bound)
        b = jax.random.uniform(k2, (1, f[i + 1]), jnp.float32, -bound, bound)
        hidden.append({"wt": w.T.astype(jnp.bfloat16), "b": b,
                       "gamma": jnp.ones((1, f[i + 1]), jnp.float32),
                       "beta": jnp.zeros((1, f[i + 1]), jnp.float32)})

    key, k1 = jax.random.split(key)
    bound = 1.0 / math.sqrt(f[-2])
    w = jax.random.uniform(k1, (f[-1], f[-2]), jnp.float32, -bound, bound)
    final_wt = w.T.astype(jnp.bfloat16)

    params = {"backbone": backbone, "hidden": hidden, "final_wt": final_wt}
    return params, f[-1]


# ------------------------------ forward ------------------------------------- #

def vicreg_forward(x_img, y_img, params, *, num_features, batch_size,
                   sim_coeff, std_coeff, cov_coeff):
    n = x_img.shape[0]
    # glue: NCHW -> [2N, C*H*W] stacked views, cast to bf16 HERE so the image
    # stream (the largest HBM->VMEM DMA) travels at half bandwidth.
    flat2d = jnp.concatenate(
        [x_img.reshape(n, -1), y_img.reshape(n, -1)], axis=0
    ).astype(jnp.bfloat16)
    # TODO(synk): FullGatherLayer / dist.all_gather is the identity for a
    #             single-device (world_size == 1) run.
    return pallas_vicreg_forward(
        flat2d, params, batch_size=batch_size, num_features=num_features,
        sim_coeff=sim_coeff, std_coeff=std_coeff, cov_coeff=cov_coeff)


# -------------------------------- main -------------------------------------- #

if __name__ == "__main__":
    # args stand-in: mlp="128-128-128" (lane-dense), batch_size=8,
    # coeffs = VICReg defaults.
    BATCH, C, H, W = 8, 4, 16, 16
    EMBEDDING = 128
    MLP = "128-128-128"
    SIM_COEFF, STD_COEFF, COV_COEFF = 25.0, 25.0, 1.0

    key = jax.random.PRNGKey(0)
    k_x, k_y, k_p = jax.random.split(key, 3)

    x = jax.random.normal(k_x, (BATCH, C, H, W), jnp.float32)
    y = jax.random.normal(k_y, (BATCH, C, H, W), jnp.float32)

    params, num_features = init_params(k_p, C * H * W, EMBEDDING, MLP)

    fwd = jax.jit(functools.partial(
        vicreg_forward, num_features=num_features, batch_size=BATCH,
        sim_coeff=SIM_COEFF, std_coeff=STD_COEFF, cov_coeff=COV_COEFF))

    loss = fwd(x, y, params)
    loss = jax.block_until_ready(loss)

    assert loss.shape == () and bool(jnp.isfinite(loss))
    print("KERNEL_OK")
</pallas_src>

<mosaic_0001>
module attributes {stable_mosaic.version = 11 : i64} {
  func.func @vicreg_fused_kernel(%arg0: i32, %arg1: memref<16x1024xbf16, #tpu.memory_space<vmem>>, %arg2: memref<1024x128xbf16, #tpu.memory_space<vmem>>, %arg3: memref<1x128xf32, #tpu.memory_space<vmem>>, %arg4: memref<128x128xbf16, #tpu.memory_space<vmem>>, %arg5: memref<1x128xf32, #tpu.memory_space<vmem>>, %arg6: memref<1x128xf32, #tpu.memory_space<vmem>>, %arg7: memref<1x128xf32, #tpu.memory_space<vmem>>, %arg8: memref<128x128xbf16, #tpu.memory_space<vmem>>, %arg9: memref<1x128xf32, #tpu.memory_space<vmem>>, %arg10: memref<1x128xf32, #tpu.memory_space<vmem>>, %arg11: memref<1x128xf32, #tpu.memory_space<vmem>>, %arg12: memref<128x128xbf16, #tpu.memory_space<vmem>>, %arg13: memref<1x1xf32, #tpu.memory_space<smem>>, %arg14: memref<16x128xf32, #tpu.memory_space<vmem>>) attributes {dimension_semantics = [#tpu.dimension_semantics<arbitrary>], iteration_bounds = array<i64: 1>, scalar_prefetch = 0 : i64, scratch_operands = 1 : i64, tpu.core_type = #tpu.core_type<tc>, window_params = [{transform_indices = @transform_0, window_bounds = array<i64: 16, 1024>}, {transform_indices = @transform_1, window_bounds = array<i64: 1024, 128>}, {pipeline_mode = #tpu.pipeline_mode<synchronous>, transform_indices = @transform_2, window_bounds = array<i64: 1, 128>}, {pipeline_mode = #tpu.pipeline_mode<synchronous>, transform_indices = @transform_3, window_bounds = array<i64: 128, 128>}, {pipeline_mode = #tpu.pipeline_mode<synchronous>, transform_indices = @transform_4, window_bounds = array<i64: 1, 128>}, {pipeline_mode = #tpu.pipeline_mode<synchronous>, transform_indices = @transform_5, window_bounds = array<i64: 1, 128>}, {pipeline_mode = #tpu.pipeline_mode<synchronous>, transform_indices = @transform_6, window_bounds = array<i64: 1, 128>}, {pipeline_mode = #tpu.pipeline_mode<synchronous>, transform_indices = @transform_7, window_bounds = array<i64: 128, 128>}, {pipeline_mode = #tpu.pipeline_mode<synchronous>, transform_indices = @transform_8, window_bounds = array<i64: 1, 128>}, {pipeline_mode = #tpu.pipeline_mode<synchronous>, transform_indices = @transform_9, window_bounds = array<i64: 1, 128>}, {pipeline_mode = #tpu.pipeline_mode<synchronous>, transform_indices = @transform_10, window_bounds = array<i64: 1, 128>}, {pipeline_mode = #tpu.pipeline_mode<synchronous>, transform_indices = @transform_11, window_bounds = array<i64: 128, 128>}, {transform_indices = @transform_12, window_bounds = array<i64: 1, 1>}]} {
    %c0_i32 = arith.constant 0 : i32
    %0 = arith.cmpi eq, %arg0, %c0_i32 : i32
    %1 = arith.extui %0 : i1 to i32
    %c0_i32_0 = arith.constant 0 : i32
    %2 = arith.cmpi ne, %1, %c0_i32_0 : i32
    scf.if %2 {
      %cst_10 = arith.constant 0.000000e+00 : f32
      %12 = vector.broadcast %cst_10 : f32 to vector<16x128xf32>
      %c0_11 = arith.constant 0 : index
      %c0_12 = arith.constant 0 : index
      %13 = vector.load %arg14[%c0_11, %c0_12] : memref<16x128xf32, #tpu.memory_space<vmem>>, vector<16x128xf32>
      tpu.vector_store %arg14[%c0_11, %c0_12], %12 {strides = array<i32>} : memref<16x128xf32, #tpu.memory_space<vmem>>, vector<16x128xf32>,
    } else {
    }
    %c0 = arith.constant 0 : index
    %c0_1 = arith.constant 0 : index
    %3 = vector.load %arg14[%c0, %c0_1] : memref<16x128xf32, #tpu.memory_space<vmem>>, vector<16x128xf32>
    %c0_2 = arith.constant 0 : index
    %c0_3 = arith.constant 0 : index
    %4 = vector.load %arg1[%c0_2, %c0_3] : memref<16x1024xbf16, #tpu.memory_space<vmem>>, vector<16x1024xbf16>
    %c0_4 = arith.constant 0 : index
    %c0_5 = arith.constant 0 : index
    %5 = vector.load %arg2[%c0_4, %c0_5] : memref<1024x128xbf16, #tpu.memory_space<vmem>>, vector<1024x128xbf16>
    %cst = arith.constant dense<0.000000e+00> : vector<16x128xf32>
    %6 = tpu.matmul %4, %5, %cst {dimension_numbers = #tpu.dot_dimension_numbers<[1], [0], [0], [1], [0, 0, 1, 1], [], []>} : vector<16x1024xbf16>, vector<1024x128xbf16>, vector<16x128xf32> -> vector<16x128xf32>
    %7 = arith.addf %3, %6 : vector<16x128xf32>
    %c0_6 = arith.constant 0 : index
    %c0_7 = arith.constant 0 : index
    %8 = vector.load %arg14[%c0_6, %c0_7] : memref<16x128xf32, #tpu.memory_space<vmem>>, vector<16x128xf32>
    tpu.vector_store %arg14[%c0_6, %c0_7], %7 {strides = array<i32>} : memref<16x128xf32, #tpu.memory_space<vmem>>, vector<16x128xf32>,
    %c0_i32_8 = arith.constant 0 : i32
    %9 = arith.cmpi eq, %arg0, %c0_i32_8 : i32
    %10 = arith.extui %9 : i1 to i32
    %c0_i32_9 = arith.constant 0 : i32
    %11 = arith.cmpi ne, %10, %c0_i32_9 : i32
    scf.if %11 {
      %c0_10 = arith.constant 0 : index
      %c0_11 = arith.constant 0 : index
      %12 = vector.load %arg14[%c0_10, %c0_11] : memref<16x128xf32, #tpu.memory_space<vmem>>, vector<16x128xf32>
      %c0_12 = arith.constant 0 : index
      %c0_13 = arith.constant 0 : index
      %13 = vector.load %arg3[%c0_12, %c0_13] : memref<1x128xf32, #tpu.memory_space<vmem>>, vector<1x128xf32>
      %14 = vector.broadcast %13 : vector<1x128xf32> to vector<16x128xf32>
      %15 = arith.addf %12, %14 : vector<16x128xf32>
      %cst_14 = arith.constant 0.000000e+00 : f32
      %16 = vector.broadcast %cst_14 : f32 to vector<16x128xf32>
      %17 = arith.maximumf %15, %16 : vector<16x128xf32>
      %18 = vector.extract_strided_slice %17 {offsets = [0, 0], sizes = [8, 128], strides = [1, 1]} : vector<16x128xf32> to vector<8x128xf32>
      %19 = vector.extract_strided_slice %17 {offsets = [8, 0], sizes = [8, 128], strides = [1, 1]} : vector<16x128xf32> to vector<8x128xf32>
      %c0_15 = arith.constant 0 : index
      %c0_16 = arith.constant 0 : index
      %20 = vector.load %arg4[%c0_15, %c0_16] : memref<128x128xbf16, #tpu.memory_space<vmem>>, vector<128x128xbf16>
      %c0_17 = arith.constant 0 : index
      %c0_18 = arith.constant 0 : index
      %21 = vector.load %arg5[%c0_17, %c0_18] : memref<1x128xf32, #tpu.memory_space<vmem>>, vector<1x128xf32>
      %c0_19 = arith.constant 0 : index
      %c0_20 = arith.constant 0 : index
      %22 = vector.load %arg6[%c0_19, %c0_20] : memref<1x128xf32, #tpu.memory_space<vmem>>, vector<1x128xf32>
      %c0_21 = arith.constant 0 : index
      %c0_22 = arith.constant 0 : index
      %23 = vector.load %arg7[%c0_21, %c0_22] : memref<1x128xf32, #tpu.memory_space<vmem>>, vector<1x128xf32>
      %24 = arith.truncf %18 : vector<8x128xf32> to vector<8x128xbf16>
      %cst_23 = arith.constant dense<0.000000e+00> : vector<8x128xf32>
      %25 = tpu.matmul %24, %20, %cst_23 {dimension_numbers = #tpu.dot_dimension_numbers<[1], [0], [0], [1], [0, 0, 1, 1], [], []>} : vector<8x128xbf16>, vector<128x128xbf16>, vector<8x128xf32> -> vector<8x128xf32>
      %26 = vector.broadcast %21 : vector<1x128xf32> to vector<8x128xf32>
      %27 = arith.addf %25, %26 : vector<8x128xf32>
      %cst_24 = arith.constant dense<0.000000e+00> : vector<128xf32>
      %28 = vector.multi_reduction <add>, %27, %cst_24 [0] : vector<8x128xf32> to vector<128xf32>
      %29 = vector.shape_cast %28 : vector<128xf32> to vector<1x128xf32>
      %cst_25 = arith.constant 8.000000e+00 : f32
      %30 = vector.broadcast %cst_25 : f32 to vector<1x128xf32>
      %31 = arith.divf %29, %30 : vector<1x128xf32>
      %32 = vector.broadcast %31 : vector<1x128xf32> to vector<8x128xf32>
      %33 = arith.subf %27, %32 : vector<8x128xf32>
      %34 = arith.mulf %33, %33 : vector<8x128xf32>
      %cst_26 = arith.constant dense<0.000000e+00> : vector<128xf32>
      %35 = vector.multi_reduction <add>, %34, %cst_26 [0] : vector<8x128xf32> to vector<128xf32>
      %36 = vector.shape_cast %35 : vector<128xf32> to vector<1x128xf32>
      %cst_27 = arith.constant 8.000000e+00 : f32
      %37 = vector.broadcast %cst_27 : f32 to vector<1x128xf32>
      %38 = arith.divf %36, %37 : vector<1x128xf32>
      %39 = vector.broadcast %31 : vector<1x128xf32> to vector<8x128xf32>
      %40 = arith.subf %27, %39 : vector<8x128xf32>
      %cst_28 = arith.constant 9.99999974E-6 : f32
      %41 = vector.broadcast %cst_28 : f32 to vector<1x128xf32>
      %42 = arith.addf %38, %41 : vector<1x128xf32>
      %43 = math.rsqrt %42 : vector<1x128xf32>
      %44 = vector.broadcast %43 : vector<1x128xf32> to vector<8x128xf32>
      %45 = arith.mulf %40, %44 : vector<8x128xf32>
      %46 = vector.broadcast %22 : vector<1x128xf32> to vector<8x128xf32>
      %47 = arith.mulf %45, %46 : vector<8x128xf32>
      %48 = vector.broadcast %23 : vector<1x128xf32> to vector<8x128xf32>
      %49 = arith.addf %47, %48 : vector<8x128xf32>
      %cst_29 = arith.constant 0.000000e+00 : f32
      %50 = vector.broadcast %cst_29 : f32 to vector<8x128xf32>
      %51 = arith.maximumf %49, %50 : vector<8x128xf32>
      %52 = arith.truncf %19 : vector<8x128xf32> to vector<8x128xbf16>
      %cst_30 = arith.constant dense<0.000000e+00> : vector<8x128xf32>
      %53 = tpu.matmul %52, %20, %cst_30 {dimension_numbers = #tpu.dot_dimension_numbers<[1], [0], [0], [1], [0, 0, 1, 1], [], []>} : vector<8x128xbf16>, vector<128x128xbf16>, vector<8x128xf32> -> vector<8x128xf32>
      %54 = vector.broadcast %21 : vector<1x128xf32> to vector<8x128xf32>
      %55 = arith.addf %53, %54 : vector<8x128xf32>
      %cst_31 = arith.constant dense<0.000000e+00> : vector<128xf32>
      %56 = vector.multi_reduction <add>, %55, %cst_31 [0] : vector<8x128xf32> to vector<128xf32>
      %57 = vector.shape_cast %56 : vector<128xf32> to vector<1x128xf32>
      %cst_32 = arith.constant 8.000000e+00 : f32
      %58 = vector.broadcast %cst_32 : f32 to vector<1x128xf32>
      %59 = arith.divf %57, %58 : vector<1x128xf32>
      %60 = vector.broadcast %59 : vector<1x128xf32> to vector<8x128xf32>
      %61 = arith.subf %55, %60 : vector<8x128xf32>
      %62 = arith.mulf %61, %61 : vector<8x128xf32>
      %cst_33 = arith.constant dense<0.000000e+00> : vector<128xf32>
      %63 = vector.multi_reduction <add>, %62, %cst_33 [0] : vector<8x128xf32> to vector<128xf32>
      %64 = vector.shape_cast %63 : vector<128xf32> to vector<1x128xf32>
      %cst_34 = arith.constant 8.000000e+00 : f32
      %65 = vector.broadcast %cst_34 : f32 to vector<1x128xf32>
      %66 = arith.divf %64, %65 : vector<1x128xf32>
      %67 = vector.broadcast %59 : vector<1x128xf32> to vector<8x128xf32>
      %68 = arith.subf %55, %67 : vector<8x128xf32>
      %cst_35 = arith.constant 9.99999974E-6 : f32
      %69 = vector.broadcast %cst_35 : f32 to vector<1x128xf32>
      %70 = arith.addf %66, %69 : vector<1x128xf32>
      %71 = math.rsqrt %70 : vector<1x128xf32>
      %72 = vector.broadcast %71 : vector<1x128xf32> to vector<8x128xf32>
      %73 = arith.mulf %68, %72 : vector<8x128xf32>
      %74 = vector.broadcast %22 : vector<1x128xf32> to vector<8x128xf32>
      %75 = arith.mulf %73, %74 : vector<8x128xf32>
      %76 = vector.broadcast %23 : vector<1x128xf32> to vector<8x128xf32>
      %77 = arith.addf %75, %76 : vector<8x128xf32>
      %cst_36 = arith.constant 0.000000e+00 : f32
      %78 = vector.broadcast %cst_36 : f32 to vector<8x128xf32>
      %79 = arith.maximumf %77, %78 : vector<8x128xf32>
      %c0_37 = arith.constant 0 : index
      %c0_38 = arith.constant 0 : index
      %80 = vector.load %arg8[%c0_37, %c0_38] : memref<128x128xbf16, #tpu.memory_space<vmem>>, vector<128x128xbf16>
      %c0_39 = arith.constant 0 : index
      %c0_40 = arith.constant 0 : index
      %81 = vector.load %arg9[%c0_39, %c0_40] : memref<1x128xf32, #tpu.memory_space<vmem>>, vector<1x128xf32>
      %c0_41 = arith.constant 0 : index
      %c0_42 = arith.constant 0 : index
      %82 = vector.load %arg10[%c0_41, %c0_42] : memref<1x128xf32, #tpu.memory_space<vmem>>, vector<1x128xf32>
      %c0_43 = arith.constant 0 : index
      %c0_44 = arith.constant 0 : index
      %83 = vector.load %arg11[%c0_43, %c0_44] : memref<1x128xf32, #tpu.memory_space<vmem>>, vector<1x128xf32>
      %84 = arith.truncf %51 : vector<8x128xf32> to vector<8x128xbf16>
      %cst_45 = arith.constant dense<0.000000e+00> : vector<8x128xf32>
      %85 = tpu.matmul %84, %80, %cst_45 {dimension_numbers = #tpu.dot_dimension_numbers<[1], [0], [0], [1], [0, 0, 1, 1], [], []>} : vector<8x128xbf16>, vector<128x128xbf16>, vector<8x128xf32> -> vector<8x128xf32>
      %86 = vector.broadcast %81 : vector<1x128xf32> to vector<8x128xf32>
      %87 = arith.addf %85, %86 : vector<8x128xf32>
      %cst_46 = arith.constant dense<0.000000e+00> : vector<128xf32>
      %88 = vector.multi_reduction <add>, %87, %cst_46 [0] : vector<8x128xf32> to vector<128xf32>
      %89 = vector.shape_cast %88 : vector<128xf32> to vector<1x128xf32>
      %cst_47 = arith.constant 8.000000e+00 : f32
      %90 = vector.broadcast %cst_47 : f32 to vector<1x128xf32>
      %91 = arith.divf %89, %90 : vector<1x128xf32>
      %92 = vector.broadcast %91 : vector<1x128xf32> to vector<8x128xf32>
      %93 = arith.subf %87, %92 : vector<8x128xf32>
      %94 = arith.mulf %93, %93 : vector<8x128xf32>
      %cst_48 = arith.constant dense<0.000000e+00> : vector<128xf32>
      %95 = vector.multi_reduction <add>, %94, %cst_48 [0] : vector<8x128xf32> to vector<128xf32>
      %96 = vector.shape_cast %95 : vector<128xf32> to vector<1x128xf32>
      %cst_49 = arith.constant 8.000000e+00 : f32
      %97 = vector.broadcast %cst_49 : f32 to vector<1x128xf32>
      %98 = arith.divf %96, %97 : vector<1x128xf32>
      %99 = vector.broadcast %91 : vector<1x128xf32> to vector<8x128xf32>
      %100 = arith.subf %87, %99 : vector<8x128xf32>
      %cst_50 = arith.constant 9.99999974E-6 : f32
      %101 = vector.broadcast %cst_50 : f32 to vector<1x128xf32>
      %102 = arith.addf %98, %101 : vector<1x128xf32>
      %103 = math.rsqrt %102 : vector<1x128xf32>
      %104 = vector.broadcast %103 : vector<1x128xf32> to vector<8x128xf32>
      %105 = arith.mulf %100, %104 : vector<8x128xf32>
      %106 = vector.broadcast %82 : vector<1x128xf32> to vector<8x128xf32>
      %107 = arith.mulf %105, %106 : vector<8x128xf32>
      %108 = vector.broadcast %83 : vector<1x128xf32> to vector<8x128xf32>
      %109 = arith.addf %107, %108 : vector<8x128xf32>
      %cst_51 = arith.constant 0.000000e+00 : f32
      %110 = vector.broadcast %cst_51 : f32 to vector<8x128xf32>
      %111 = arith.maximumf %109, %110 : vector<8x128xf32>
      %112 = arith.truncf %79 : vector<8x128xf32> to vector<8x128xbf16>
      %cst_52 = arith.constant dense<0.000000e+00> : vector<8x128xf32>
      %113 = tpu.matmul %112, %80, %cst_52 {dimension_numbers = #tpu.dot_dimension_numbers<[1], [0], [0], [1], [0, 0, 1, 1], [], []>} : vector<8x128xbf16>, vector<128x128xbf16>, vector<8x128xf32> -> vector<8x128xf32>
      %114 = vector.broadcast %81 : vector<1x128xf32> to vector<8x128xf32>
      %115 = arith.addf %113, %114 : vector<8x128xf32>
      %cst_53 = arith.constant dense<0.000000e+00> : vector<128xf32>
      %116 = vector.multi_reduction <add>, %115, %cst_53 [0] : vector<8x128xf32> to vector<128xf32>
      %117 = vector.shape_cast %116 : vector<128xf32> to vector<1x128xf32>
      %cst_54 = arith.constant 8.000000e+00 : f32
      %118 = vector.broadcast %cst_54 : f32 to vector<1x128xf32>
      %119 = arith.divf %117, %118 : vector<1x128xf32>
      %120 = vector.broadcast %119 : vector<1x128xf32> to vector<8x128xf32>
      %121 = arith.subf %115, %120 : vector<8x128xf32>
      %122 = arith.mulf %121, %121 : vector<8x128xf32>
      %cst_55 = arith.constant dense<0.000000e+00> : vector<128xf32>
      %123 = vector.multi_reduction <add>, %122, %cst_55 [0] : vector<8x128xf32> to vector<128xf32>
      %124 = vector.shape_cast %123 : vector<128xf32> to vector<1x128xf32>
      %cst_56 = arith.constant 8.000000e+00 : f32
      %125 = vector.broadcast %cst_56 : f32 to vector<1x128xf32>
      %126 = arith.divf %124, %125 : vector<1x128xf32>
      %127 = vector.broadcast %119 : vector<1x128xf32> to vector<8x128xf32>
      %128 = arith.subf %115, %127 : vector<8x128xf32>
      %cst_57 = arith.constant 9.99999974E-6 : f32
      %129 = vector.broadcast %cst_57 : f32 to vector<1x128xf32>
      %130 = arith.addf %126, %129 : vector<1x128xf32>
      %131 = math.rsqrt %130 : vector<1x128xf32>
      %132 = vector.broadcast %131 : vector<1x128xf32> to vector<8x128xf32>
      %133 = arith.mulf %128, %132 : vector<8x128xf32>
      %134 = vector.broadcast %82 : vector<1x128xf32> to vector<8x128xf32>
      %135 = arith.mulf %133, %134 : vector<8x128xf32>
      %136 = vector.broadcast %83 : vector<1x128xf32> to vector<8x128xf32>
      %137 = arith.addf %135, %136 : vector<8x128xf32>
      %cst_58 = arith.constant 0.000000e+00 : f32
      %138 = vector.broadcast %cst_58 : f32 to vector<8x128xf32>
      %139 = arith.maximumf %137, %138 : vector<8x128xf32>
      %c0_59 = arith.constant 0 : index
      %c0_60 = arith.constant 0 : index
      %140 = vector.load %arg12[%c0_59, %c0_60] : memref<128x128xbf16, #tpu.memory_space<vmem>>, vector<128x128xbf16>
      %141 = arith.truncf %111 : vector<8x128xf32> to vector<8x128xbf16>
      %cst_61 = arith.constant dense<0.000000e+00> : vector<8x128xf32>
      %142 = tpu.matmul %141, %140, %cst_61 {dimension_numbers = #tpu.dot_dimension_numbers<[1], [0], [0], [1], [0, 0, 1, 1], [], []>} : vector<8x128xbf16>, vector<128x128xbf16>, vector<8x128xf32> -> vector<8x128xf32>
      %143 = arith.truncf %139 : vector<8x128xf32> to vector<8x128xbf16>
      %cst_62 = arith.constant dense<0.000000e+00> : vector<8x128xf32>
      %144 = tpu.matmul %143, %140, %cst_62 {dimension_numbers = #tpu.dot_dimension_numbers<[1], [0], [0], [1], [0, 0, 1, 1], [], []>} : vector<8x128xbf16>, vector<128x128xbf16>, vector<8x128xf32> -> vector<8x128xf32>
      %145 = arith.subf %142, %144 : vector<8x128xf32>
      %146 = arith.mulf %145, %145 : vector<8x128xf32>
      %147 = vector.shape_cast %146 : vector<8x128xf32> to vector<1x8x128xf32>
      %cst_63 = arith.constant dense<0.000000e+00> : vector<1xf32>
      %148 = vector.multi_reduction <add>, %147, %cst_63 [1, 2] : vector<1x8x128xf32> to vector<1xf32>
      %149 = vector.shape_cast %148 : vector<1xf32> to vector<1x1x1xf32>
      %150 = vector.extract %149[0, 0, 0] : f32 from vector<1x1x1xf32>
      %cst_64 = arith.constant 1.024000e+03 : f32
      %151 = arith.divf %150, %cst_64 : f32
      %cst_65 = arith.constant dense<0.000000e+00> : vector<128xf32>
      %152 = vector.multi_reduction <add>, %142, %cst_65 [0] : vector<8x128xf32> to vector<128xf32>
      %153 = vector.shape_cast %152 : vector<128xf32> to vector<1x128xf32>
      %cst_66 = arith.constant 8.000000e+00 : f32
      %154 = vector.broadcast %cst_66 : f32 to vector<1x128xf32>
      %155 = arith.divf %153, %154 : vector<1x128xf32>
      %156 = vector.broadcast %155 : vector<1x128xf32> to vector<8x128xf32>
      %157 = arith.subf %142, %156 : vector<8x128xf32>
      %cst_67 = arith.constant dense<0.000000e+00> : vector<128xf32>
      %158 = vector.multi_reduction <add>, %144, %cst_67 [0] : vector<8x128xf32> to vector<128xf32>
      %159 = vector.shape_cast %158 : vector<128xf32> to vector<1x128xf32>
      %cst_68 = arith.constant 8.000000e+00 : f32
      %160 = vector.broadcast %cst_68 : f32 to vector<1x128xf32>
      %161 = arith.divf %159, %160 : vector<1x128xf32>
      %162 = vector.broadcast %161 : vector<1x128xf32> to vector<8x128xf32>
      %163 = arith.subf %144, %162 : vector<8x128xf32>
      %164 = arith.mulf %157, %157 : vector<8x128xf32>
      %cst_69 = arith.constant dense<0.000000e+00> : vector<128xf32>
      %165 = vector.multi_reduction <add>, %164, %cst_69 [0] : vector<8x128xf32> to vector<128xf32>
      %166 = vector.shape_cast %165 : vector<128xf32> to vector<1x128xf32>
      %167 = arith.mulf %163, %163 : vector<8x128xf32>
      %cst_70 = arith.constant dense<0.000000e+00> : vector<128xf32>
      %168 = vector.multi_reduction <add>, %167, %cst_70 [0] : vector<8x128xf32> to vector<128xf32>
      %169 = vector.shape_cast %168 : vector<128xf32> to vector<1x128xf32>
      %cst_71 = arith.constant 7.000000e+00 : f32
      %170 = vector.broadcast %cst_71 : f32 to vector<1x128xf32>
      %171 = arith.divf %166, %170 : vector<1x128xf32>
      %cst_72 = arith.constant 9.99999974E-5 : f32
      %172 = vector.broadcast %cst_72 : f32 to vector<1x128xf32>
      %173 = arith.addf %171, %172 : vector<1x128xf32>
      %174 = math.sqrt %173 : vector<1x128xf32>
      %cst_73 = arith.constant 7.000000e+00 : f32
      %175 = vector.broadcast %cst_73 : f32 to vector<1x128xf32>
      %176 = arith.divf %169, %175 : vector<1x128xf32>
      %cst_74 = arith.constant 9.99999974E-5 : f32
      %177 = vector.broadcast %cst_74 : f32 to vector<1x128xf32>
      %178 = arith.addf %176, %177 : vector<1x128xf32>
      %179 = math.sqrt %178 : vector<1x128xf32>
      %cst_75 = arith.constant 1.000000e+00 : f32
      %180 = vector.broadcast %cst_75 : f32 to vector<1x128xf32>
      %181 = arith.subf %180, %174 : vector<1x128xf32>
      %cst_76 = arith.constant 0.000000e+00 : f32
      %182 = vector.broadcast %cst_76 : f32 to vector<1x128xf32>
      %183 = arith.maximumf %181, %182 : vector<1x128xf32>
      %184 = vector.shape_cast %183 : vector<1x128xf32> to vector<1x1x128xf32>
      %cst_77 = arith.constant dense<0.000000e+00> : vector<1xf32>
      %185 = vector.multi_reduction <add>, %184, %cst_77 [1, 2] : vector<1x1x128xf32> to vector<1xf32>
      %186 = vector.shape_cast %185 : vector<1xf32> to vector<1x1x1xf32>
      %187 = vector.extract %186[0, 0, 0] : f32 from vector<1x1x1xf32>
      %cst_78 = arith.constant 1.280000e+02 : f32
      %188 = arith.divf %187, %cst_78 : f32
      %cst_79 = arith.constant 2.000000e+00 : f32
      %189 = arith.divf %188, %cst_79 : f32
      %cst_80 = arith.constant 1.000000e+00 : f32
      %190 = vector.broadcast %cst_80 : f32 to vector<1x128xf32>
      %191 = arith.subf %190, %179 : vector<1x128xf32>
      %cst_81 = arith.constant 0.000000e+00 : f32
      %192 = vector.broadcast %cst_81 : f32 to vector<1x128xf32>
      %193 = arith.maximumf %191, %192 : vector<1x128xf32>
      %194 = vector.shape_cast %193 : vector<1x128xf32> to vector<1x1x128xf32>
      %cst_82 = arith.constant dense<0.000000e+00> : vector<1xf32>
      %195 = vector.multi_reduction <add>, %194, %cst_82 [1, 2] : vector<1x1x128xf32> to vector<1xf32>
      %196 = vector.shape_cast %195 : vector<1xf32> to vector<1x1x1xf32>
      %197 = vector.extract %196[0, 0, 0] : f32 from vector<1x1x1xf32>
      %cst_83 = arith.constant 1.280000e+02 : f32
      %198 = arith.divf %197, %cst_83 : f32
      %cst_84 = arith.constant 2.000000e+00 : f32
      %199 = arith.divf %198, %cst_84 : f32
      %200 = arith.addf %189, %199 : f32
      %cst_85 = arith.constant dense<0.000000e+00> : vector<128x128xf32>
      %201 = tpu.matmul %157, %157, %cst_85 {dimension_numbers = #tpu.dot_dimension_numbers<[0], [0], [1], [1], [0, 1, 1, 1], [], []>} : vector<8x128xf32>, vector<8x128xf32>, vector<128x128xf32> -> vector<128x128xf32>
      %cst_86 = arith.constant dense<0.000000e+00> : vector<128x128xf32>
      %202 = tpu.matmul %163, %163, %cst_86 {dimension_numbers = #tpu.dot_dimension_numbers<[0], [0], [1], [1], [0, 1, 1, 1], [], []>} : vector<8x128xf32>, vector<8x128xf32>, vector<128x128xf32> -> vector<128x128xf32>
      %cst_87 = arith.constant 7.000000e+00 : f32
      %203 = vector.broadcast %cst_87 : f32 to vector<128x128xf32>
      %204 = arith.divf %201, %203 : vector<128x128xf32>
      %cst_88 = arith.constant 7.000000e+00 : f32
      %205 = vector.broadcast %cst_88 : f32 to vector<128x128xf32>
      %206 = arith.divf %202, %205 : vector<128x128xf32>
      %cst_89 = arith.constant 7.000000e+00 : f32
      %207 = vector.broadcast %cst_89 : f32 to vector<1x128xf32>
      %208 = arith.divf %166, %207 : vector<1x128xf32>
      %cst_90 = arith.constant 7.000000e+00 : f32
      %209 = vector.broadcast %cst_90 : f32 to vector<1x128xf32>
      %210 = arith.divf %169, %209 : vector<1x128xf32>
      %211 = arith.mulf %204, %204 : vector<128x128xf32>
      %212 = vector.shape_cast %211 : vector<128x128xf32> to vector<1x128x128xf32>
      %cst_91 = arith.constant dense<0.000000e+00> : vector<1xf32>
      %213 = vector.multi_reduction <add>, %212, %cst_91 [1, 2] : vector<1x128x128xf32> to vector<1xf32>
      %214 = vector.shape_cast %213 : vector<1xf32> to vector<1x1x1xf32>
      %215 = vector.extract %214[0, 0, 0] : f32 from vector<1x1x1xf32>
      %216 = arith.mulf %208, %208 : vector<1x128xf32>
      %217 = vector.shape_cast %216 : vector<1x128xf32> to vector<1x1x128xf32>
      %cst_92 = arith.constant dense<0.000000e+00> : vector<1xf32>
      %218 = vector.multi_reduction <add>, %217, %cst_92 [1, 2] : vector<1x1x128xf32> to vector<1xf32>
      %219 = vector.shape_cast %218 : vector<1xf32> to vector<1x1x1xf32>
      %220 = vector.extract %219[0, 0, 0] : f32 from vector<1x1x1xf32>
      %221 = arith.subf %215, %220 : f32
      %cst_93 = arith.constant 1.280000e+02 : f32
      %222 = arith.divf %221, %cst_93 : f32
      %223 = arith.mulf %206, %206 : vector<128x128xf32>
      %224 = vector.shape_cast %223 : vector<128x128xf32> to vector<1x128x128xf32>
      %cst_94 = arith.constant dense<0.000000e+00> : vector<1xf32>
      %225 = vector.multi_reduction <add>, %224, %cst_94 [1, 2] : vector<1x128x128xf32> to vector<1xf32>
      %226 = vector.shape_cast %225 : vector<1xf32> to vector<1x1x1xf32>
      %227 = vector.extract %226[0, 0, 0] : f32 from vector<1x1x1xf32>
      %228 = arith.mulf %210, %210 : vector<1x128xf32>
      %229 = vector.shape_cast %228 : vector<1x128xf32> to vector<1x1x128xf32>
      %cst_95 = arith.constant dense<0.000000e+00> : vector<1xf32>
      %230 = vector.multi_reduction <add>, %229, %cst_95 [1, 2] : vector<1x1x128xf32> to vector<1xf32>
      %231 = vector.shape_cast %230 : vector<1xf32> to vector<1x1x1xf32>
      %232 = vector.extract %231[0, 0, 0] : f32 from vector<1x1x1xf32>
      %233 = arith.subf %227, %232 : f32
      %cst_96 = arith.constant 1.280000e+02 : f32
      %234 = arith.divf %233, %cst_96 : f32
      %235 = arith.addf %222, %234 : f32
      %cst_97 = arith.constant 2.500000e+01 : f32
      %236 = arith.mulf %cst_97, %151 : f32
      %cst_98 = arith.constant 2.500000e+01 : f32
      %237 = arith.mulf %cst_98, %200 : f32
      %238 = arith.addf %236, %237 : f32
      %cst_99 = arith.constant 1.000000e+00 : f32
      %239 = arith.mulf %cst_99, %235 : f32
      %240 = arith.addf %238, %239 : f32
      %c0_100 = arith.constant 0 : index
      %c0_101 = arith.constant 0 : index
      %241 = memref.load %arg13[%c0_100, %c0_101] : memref<1x1xf32, #tpu.memory_space<smem>>
      memref.store %240, %arg13[%c0_100, %c0_101] : memref<1x1xf32, #tpu.memory_space<smem>>
    } else {
    }
    return
  }
  func.func @transform_0(%arg0: i32) -> (i32, i32) {
    %c0_i32 = arith.constant 0 : i32
    %c0_i32_0 = arith.constant 0 : i32
    return %c0_i32, %arg0 : i32, i32
  }
  func.func @transform_1(%arg0: i32) -> (i32, i32) {
    %c0_i32 = arith.constant 0 : i32
    %c0_i32_0 = arith.constant 0 : i32
    return %arg0, %c0_i32 : i32, i32
  }
  func.func @transform_2(%arg0: i32) -> (i32, i32) {
    %c0_i32 = arith.constant 0 : i32
    %c0_i32_0 = arith.constant 0 : i32
    %c0_i32_1 = arith.constant 0 : i32
    return %c0_i32, %c0_i32_0 : i32, i32
  }
  func.func @transform_3(%arg0: i32) -> (i32, i32) {
    %c0_i32 = arith.constant 0 : i32
    %c0_i32_0 = arith.constant 0 : i32
    %c0_i32_1 = arith.constant 0 : i32
    return %c0_i32, %c0_i32_0 : i32, i32
  }
  func.func @transform_4(%arg0: i32) -> (i32, i32) {
    %c0_i32 = arith.constant 0 : i32
    %c0_i32_0 = arith.constant 0 : i32
    %c0_i32_1 = arith.constant 0 : i32
    return %c0_i32, %c0_i32_0 : i32, i32
  }
  func.func @transform_5(%arg0: i32) -> (i32, i32) {
    %c0_i32 = arith.constant 0 : i32
    %c0_i32_0 = arith.constant 0 : i32
    %c0_i32_1 = arith.constant 0 : i32
    return %c0_i32, %c0_i32_0 : i32, i32
  }
  func.func @transform_6(%arg0: i32) -> (i32, i32) {
    %c0_i32 = arith.constant 0 : i32
    %c0_i32_0 = arith.constant 0 : i32
    %c0_i32_1 = arith.constant 0 : i32
    return %c0_i32, %c0_i32_0 : i32, i32
  }
  func.func @transform_7(%arg0: i32) -> (i32, i32) {
    %c0_i32 = arith.constant 0 : i32
    %c0_i32_0 = arith.constant 0 : i32
    %c0_i32_1 = arith.constant 0 : i32
    return %c0_i32, %c0_i32_0 : i32, i32
  }
  func.func @transform_8(%arg0: i32) -> (i32, i32) {
    %c0_i32 = arith.constant 0 : i32
    %c0_i32_0 = arith.constant 0 : i32
    %c0_i32_1 = arith.constant 0 : i32
    return %c0_i32, %c0_i32_0 : i32, i32
  }
  func.func @transform_9(%arg0: i32) -> (i32, i32) {
    %c0_i32 = arith.constant 0 : i32
    %c0_i32_0 = arith.constant 0 : i32
    %c0_i32_1 = arith.constant 0 : i32
    return %c0_i32, %c0_i32_0 : i32, i32
  }
  func.func @transform_10(%arg0: i32) -> (i32, i32) {
    %c0_i32 = arith.constant 0 : i32
    %c0_i32_0 = arith.constant 0 : i32
    %c0_i32_1 = arith.constant 0 : i32
    return %c0_i32, %c0_i32_0 : i32, i32
  }
  func.func @transform_11(%arg0: i32) -> (i32, i32) {
    %c0_i32 = arith.constant 0 : i32
    %c0_i32_0 = arith.constant 0 : i32
    %c0_i32_1 = arith.constant 0 : i32
    return %c0_i32, %c0_i32_0 : i32, i32
  }
  func.func @transform_12(%arg0: i32) -> (i32, i32) {
    %c0_i32 = arith.constant 0 : i32
    %c0_i32_0 = arith.constant 0 : i32
    %c0_i32_1 = arith.constant 0 : i32
    return %c0_i32, %c0_i32_0 : i32, i32
  }
}

</mosaic_0001>

<llo_original>
// kernel: vicreg_forward.1
$region0: #{vicreg_forward.1}
  #allocation0 [shape = 'u32[]', space=smem, size = 0x4, offset = 0x4, fixed_abs, tag = 'smem constant byte address 0x4 - core index']
  #allocation1 [shape = 'u32[144,128]{1,0:T(1,128)}', space=vmem, size = 0x12000, scoped, tag = 'internal scratch']
  #allocation2 [shape = 'f32[16,128]{1,0:T(8,128)}', space=vmem, size = 0x2000, scoped, tag = 'scratch operand']
  %s0 = inlined_call_operand.vmem [shape: bf16[16,1024], index: 0, kind: input, shape index: {}]
  %s1 = inlined_call_operand.vmem [shape: bf16[1024,128], index: 1, kind: input, shape index: {}]
  %s2 = inlined_call_operand.vmem [shape: f32[1,128], index: 2, kind: input, shape index: {}]
  %s3 = inlined_call_operand.vmem [shape: bf16[128,128], index: 3, kind: input, shape index: {}]
  %s4 = inlined_call_operand.vmem [shape: f32[1,128], index: 4, kind: input, shape index: {}]
  %s5 = inlined_call_operand.vmem [shape: f32[1,128], index: 5, kind: input, shape index: {}]
  %s6 = inlined_call_operand.vmem [shape: f32[1,128], index: 6, kind: input, shape index: {}]
  %s7 = inlined_call_operand.vmem [shape: bf16[128,128], index: 7, kind: input, shape index: {}]
  %s8 = inlined_call_operand.vmem [shape: f32[1,128], index: 8, kind: input, shape index: {}]
  %s9 = inlined_call_operand.vmem [shape: f32[1,128], index: 9, kind: input, shape index: {}]
  %s10 = inlined_call_operand.vmem [shape: f32[1,128], index: 10, kind: input, shape index: {}]
  %s11 = inlined_call_operand.vmem [shape: bf16[128,128], index: 11, kind: input, shape index: {}]
  %s12 = inlined_call_operand.hbm [shape: f32[1,1], index: 12, kind: output, shape index: {}]
  %s13 = sld [smem:[#allocation0]]
  $region66: #{vicreg_forward.1} parent=0
    _
  %s15 = ssub.s32 1, %s13
  %s16 = scalar_select 0, %s15, %s13
  $region1: #{vicreg_forward.1} parent=0
    #allocation3 [shape = 'u8[512]{0}', space=smem, size = 0x200, scoped, tag = 'output window, operand 0, single buffered']
    #allocation4 [shape = 's32[1]{0}', space=sflag, size = 0x4, scoped, tag = 'scoped memory for vicreg_forward.1']
    %17 = vsyncpa [#allocation4], 0
    // Predicated region
    $region2: #{vicreg_forward.1} parent=1 // pred_check
      _
    $region3: #{vicreg_forward.1} parent=1 // pred_check_branch
      %19 = sbr.rel (0) target = $region5
    $region4: #{vicreg_forward.1} parent=1 // pred_region
      _
    $region5: #{vicreg_forward.1} parent=1 // pred_fallthru
      _
    // Predicated region
    $region6: #{vicreg_forward.1} parent=1 // pred_check
      _
    $region7: #{vicreg_forward.1} parent=1 // pred_check_branch
      %21 = sbr.rel (0) target = $region9
    $region8: #{vicreg_forward.1} parent=1 // pred_region
      _
    $region9: #{vicreg_forward.1} parent=1 // pred_fallthru
      _
    // Predicated region
    $region10: #{vicreg_forward.1} parent=1 // pred_check
      _
    $region11: #{vicreg_forward.1} parent=1 // pred_check_branch
      %23 = sbr.rel (0) target = $region13
    $region12: #{vicreg_forward.1} parent=1 // pred_region
      _
    $region13: #{vicreg_forward.1} parent=1 // pred_fallthru
      _
    // Predicated region
    $region14: #{vicreg_forward.1} parent=1 // pred_check
      _
    $region15: #{vicreg_forward.1} parent=1 // pred_check_branch
      %25 = sbr.rel (0) target = $region17
    $region16: #{vicreg_forward.1} parent=1 // pred_region
      _
    $region17: #{vicreg_forward.1} parent=1 // pred_fallthru
      _
    // Predicated region
    $region18: #{vicreg_forward.1} parent=1 // pred_check
      _
    $region19: #{vicreg_forward.1} parent=1 // pred_check_branch
      %27 = sbr.rel (0) target = $region21
    $region20: #{vicreg_forward.1} parent=1 // pred_region
      _
    $region21: #{vicreg_forward.1} parent=1 // pred_fallthru
      _
    // Predicated region
    $region22: #{vicreg_forward.1} parent=1 // pred_check
      _
    $region23: #{vicreg_forward.1} parent=1 // pred_check_branch
      %29 = sbr.rel (0) target = $region25
    $region24: #{vicreg_forward.1} parent=1 // pred_region
      _
    $region25: #{vicreg_forward.1} parent=1 // pred_fallthru
      _
    // Predicated region
    $region26: #{vicreg_forward.1} parent=1 // pred_check
      _
    $region27: #{vicreg_forward.1} parent=1 // pred_check_branch
      %31 = sbr.rel (0) target = $region29
    $region28: #{vicreg_forward.1} parent=1 // pred_region
      _
    $region29: #{vicreg_forward.1} parent=1 // pred_fallthru
      _
    // Predicated region
    $region30: #{vicreg_forward.1} parent=1 // pred_check
      _
    $region31: #{vicreg_forward.1} parent=1 // pred_check_branch
      %33 = sbr.rel (0) target = $region33
    $region32: #{vicreg_forward.1} parent=1 // pred_region
      _
    $region33: #{vicreg_forward.1} parent=1 // pred_fallthru
      _
    // Predicated region
    $region34: #{vicreg_forward.1} parent=1 // pred_check
      _
    $region35: #{vicreg_forward.1} parent=1 // pred_check_branch
      %35 = sbr.rel (0) target = $region37
    $region36: #{vicreg_forward.1} parent=1 // pred_region
      _
    $region37: #{vicreg_forward.1} parent=1 // pred_fallthru
      _
    // Predicated region
    $region38: #{vicreg_forward.1} parent=1 // pred_check
      _
    $region39: #{vicreg_forward.1} parent=1 // pred_check_branch
      %37 = sbr.rel (0) target = $region41
    $region40: #{vicreg_forward.1} parent=1 // pred_region
      _
    $region41: #{vicreg_forward.1} parent=1 // pred_fallthru
      _
    // Predicated region
    $region42: #{vicreg_forward.1} parent=1 // pred_check
      _
    $region43: #{vicreg_forward.1} parent=1 // pred_check_branch
      %39 = sbr.rel (0) target = $region45
    $region44: #{vicreg_forward.1} parent=1 // pred_region
      _
    $region45: #{vicreg_forward.1} parent=1 // pred_fallthru
      _
    // Predicated region
    $region46: #{vicreg_forward.1} parent=1 // pred_check
      _
    $region47: #{vicreg_forward.1} parent=1 // pred_check_branch
      %41 = sbr.rel (0) target = $region49
    $region48: #{vicreg_forward.1} parent=1 // pred_region
      _
    $region49: #{vicreg_forward.1} parent=1 // pred_fallthru
      _
    %p43 = scmp.eq.s32.totalorder 0, 0
    // Predicated region
    $region50: #{vicreg_forward.1} parent=1 // pred_check
      %p44 = pneg %p43
    $region51: #{vicreg_forward.1} parent=1 // pred_check_branch
      %46 = sbr.rel (%p44) target = $region53
    $region52: #{vicreg_forward.1} parent=1 // pred_region
      %47 = vst [vmem:[#allocation2] sm:$0xff] 0.0
      %48 = vst [vmem:[#allocation2 + $0x8] sm:$0xff] 0.0
    $region53: #{vicreg_forward.1} parent=1 // pred_fallthru
      _
    %v49 = vld [vmem:[#allocation2] sm:$0xff]
    %v50 = vld [vmem:[#allocation2 + $0x8] sm:$0xff]
    %v51 = vld [vmem:[%s0] sm:$0xff]
    %v52 = vld [vmem:[%s0 + $0x8] sm:$0xff]
    %v53 = vld [vmem:[%s0 + $0x10] sm:$0xff]
    %v54 = vld [vmem:[%s0 + $0x18] sm:$0xff]
    %v55 = vld [vmem:[%s0 + $0x20] sm:$0xff]
    %v56 = vld [vmem:[%s0 + $0x28] sm:$0xff]
    %v57 = vld [vmem:[%s0 + $0x30] sm:$0xff]
    %v58 = vld [vmem:[%s0 + $0x38] sm:$0xff]
    %v59 = vld [vmem:[%s1] sm:$0xf]
    %v60 = vld [vmem:[%s1 + $0x4] sm:$0xf]
    %v61 = vld [vmem:[%s1 + $0x8] sm:$0xf]
    %v62 = vld [vmem:[%s1 + $0xc] sm:$0xf]
    %v63 = vld [vmem:[%s1 + $0x10] sm:$0xf]
    %v64 = vld [vmem:[%s1 + $0x14] sm:$0xf]
    %v65 = vld [vmem:[%s1 + $0x18] sm:$0xf]
    %v66 = vld [vmem:[%s1 + $0x1c] sm:$0xf]
    %v67 = vld [vmem:[%s1 + $0x20] sm:$0xf]
    %v68 = vld [vmem:[%s1 + $0x24] sm:$0xf]
    %v69 = vld [vmem:[%s1 + $0x28] sm:$0xf]
    %v70 = vld [vmem:[%s1 + $0x2c] sm:$0xf]
    %v71 = vld [vmem:[%s1 + $0x30] sm:$0xf]
    %v72 = vld [vmem:[%s1 + $0x34] sm:$0xf]
    %v73 = vld [vmem:[%s1 + $0x38] sm:$0xf]
    %v74 = vld [vmem:[%s1 + $0x3c] sm:$0xf]
    %v75 = vld [vmem:[%s1 + $0x40] sm:$0xf]
    %v76 = vld [vmem:[%s1 + $0x44] sm:$0xf]
    %v77 = vld [vmem:[%s1 + $0x48] sm:$0xf]
    %v78 = vld [vmem:[%s1 + $0x4c] sm:$0xf]
    %v79 = vld [vmem:[%s1 + $0x50] sm:$0xf]
    %v80 = vld [vmem:[%s1 + $0x54] sm:$0xf]
    %v81 = vld [vmem:[%s1 + $0x58] sm:$0xf]
    %v82 = vld [vmem:[%s1 + $0x5c] sm:$0xf]
    %v83 = vld [vmem:[%s1 + $0x60] sm:$0xf]
    %v84 = vld [vmem:[%s1 + $0x64] sm:$0xf]
    %v85 = vld [vmem:[%s1 + $0x68] sm:$0xf]
    %v86 = vld [vmem:[%s1 + $0x6c] sm:$0xf]
    %v87 = vld [vmem:[%s1 + $0x70] sm:$0xf]
    %v88 = vld [vmem:[%s1 + $0x74] sm:$0xf]
    %v89 = vld [vmem:[%s1 + $0x78] sm:$0xf]
    %v90 = vld [vmem:[%s1 + $0x7c] sm:$0xf]
    %v91 = vld [vmem:[%s1 + $0x80] sm:$0xf]
    %v92 = vld [vmem:[%s1 + $0x84] sm:$0xf]
    %v93 = vld [vmem:[%s1 + $0x88] sm:$0xf]
    %v94 = vld [vmem:[%s1 + $0x8c] sm:$0xf]
    %v95 = vld [vmem:[%s1 + $0x90] sm:$0xf]
    %v96 = vld [vmem:[%s1 + $0x94] sm:$0xf]
    %v97 = vld [vmem:[%s1 + $0x98] sm:$0xf]
    %v98 = vld [vmem:[%s1 + $0x9c] sm:$0xf]
    %v99 = vld [vmem:[%s1 + $0xa0] sm:$0xf]
    %v100 = vld [vmem:[%s1 + $0xa4] sm:$0xf]
    %v101 = vld [vmem:[%s1 + $0xa8] sm:$0xf]
    %v102 = vld [vmem:[%s1 + $0xac] sm:$0xf]
    %v103 = vld [vmem:[%s1 + $0xb0] sm:$0xf]
    %v104 = vld [vmem:[%s1 + $0xb4] sm:$0xf]
    %v105 = vld [vmem:[%s1 + $0xb8] sm:$0xf]
    %v106 = vld [vmem:[%s1 + $0xbc] sm:$0xf]
    %v107 = vld [vmem:[%s1 + $0xc0] sm:$0xf]
    %v108 = vld [vmem:[%s1 + $0xc4] sm:$0xf]
    %v109 = vld [vmem:[%s1 + $0xc8] sm:$0xf]
    %v110 = vld [vmem:[%s1 + $0xcc] sm:$0xf]
    %v111 = vld [vmem:[%s1 + $0xd0] sm:$0xf]
    %v112 = vld [vmem:[%s1 + $0xd4] sm:$0xf]
    %v113 = vld [vmem:[%s1 + $0xd8] sm:$0xf]
    %v114 = vld [vmem:[%s1 + $0xdc] sm:$0xf]
    %v115 = vld [vmem:[%s1 + $0xe0] sm:$0xf]
    %v116 = vld [vmem:[%s1 + $0xe4] sm:$0xf]
    %v117 = vld [vmem:[%s1 + $0xe8] sm:$0xf]
    %v118 = vld [vmem:[%s1 + $0xec] sm:$0xf]
    %v119 = vld [vmem:[%s1 + $0xf0] sm:$0xf]
    %v120 = vld [vmem:[%s1 + $0xf4] sm:$0xf]
    %v121 = vld [vmem:[%s1 + $0xf8] sm:$0xf]
    %v122 = vld [vmem:[%s1 + $0xfc] sm:$0xf]
    %v123 = vld [vmem:[%s1 + $0x100] sm:$0xf]
    %v124 = vld [vmem:[%s1 + $0x104] sm:$0xf]
    %v125 = vld [vmem:[%s1 + $0x108] sm:$0xf]
    %v126 = vld [vmem:[%s1 + $0x10c] sm:$0xf]
    %v127 = vld [vmem:[%s1 + $0x110] sm:$0xf]
    %v128 = vld [vmem:[%s1 + $0x114] sm:$0xf]
    %v129 = vld [vmem:[%s1 + $0x118] sm:$0xf]
    %v130 = vld [vmem:[%s1 + $0x11c] sm:$0xf]
    %v131 = vld [vmem:[%s1 + $0x120] sm:$0xf]
    %v132 = vld [vmem:[%s1 + $0x124] sm:$0xf]
    %v133 = vld [vmem:[%s1 + $0x128] sm:$0xf]
    %v134 = vld [vmem:[%s1 + $0x12c] sm:$0xf]
    %v135 = vld [vmem:[%s1 + $0x130] sm:$0xf]
    %v136 = vld [vmem:[%s1 + $0x134] sm:$0xf]
    %v137 = vld [vmem:[%s1 + $0x138] sm:$0xf]
    %v138 = vld [vmem:[%s1 + $0x13c] sm:$0xf]
    %v139 = vld [vmem:[%s1 + $0x140] sm:$0xf]
    %v140 = vld [vmem:[%s1 + $0x144] sm:$0xf]
    %v141 = vld [vmem:[%s1 + $0x148] sm:$0xf]
    %v142 = vld [vmem:[%s1 + $0x14c] sm:$0xf]
    %v143 = vld [vmem:[%s1 + $0x150] sm:$0xf]
    %v144 = vld [vmem:[%s1 + $0x154] sm:$0xf]
    %v145 = vld [vmem:[%s1 + $0x158] sm:$0xf]
    %v146 = vld [vmem:[%s1 + $0x15c] sm:$0xf]
    %v147 = vld [vmem:[%s1 + $0x160] sm:$0xf]
    %v148 = vld [vmem:[%s1 + $0x164] sm:$0xf]
    %v149 = vld [vmem:[%s1 + $0x168] sm:$0xf]
    %v150 = vld [vmem:[%s1 + $0x16c] sm:$0xf]
    %v151 = vld [vmem:[%s1 + $0x170] sm:$0xf]
    %v152 = vld [vmem:[%s1 + $0x174] sm:$0xf]
    %v153 = vld [vmem:[%s1 + $0x178] sm:$0xf]
    %v154 = vld [vmem:[%s1 + $0x17c] sm:$0xf]
    %v155 = vld [vmem:[%s1 + $0x180] sm:$0xf]
    %v156 = vld [vmem:[%s1 + $0x184] sm:$0xf]
    %v157 = vld [vmem:[%s1 + $0x188] sm:$0xf]
    %v158 = vld [vmem:[%s1 + $0x18c] sm:$0xf]
    %v159 = vld [vmem:[%s1 + $0x190] sm:$0xf]
    %v160 = vld [vmem:[%s1 + $0x194] sm:$0xf]
    %v161 = vld [vmem:[%s1 + $0x198] sm:$0xf]
    %v162 = vld [vmem:[%s1 + $0x19c] sm:$0xf]
    %v163 = vld [vmem:[%s1 + $0x1a0] sm:$0xf]
    %v164 = vld [vmem:[%s1 + $0x1a4] sm:$0xf]
    %v165 = vld [vmem:[%s1 + $0x1a8] sm:$0xf]
    %v166 = vld [vmem:[%s1 + $0x1ac] sm:$0xf]
    %v167 = vld [vmem:[%s1 + $0x1b0] sm:$0xf]
    %v168 = vld [vmem:[%s1 + $0x1b4] sm:$0xf]
    %v169 = vld [vmem:[%s1 + $0x1b8] sm:$0xf]
    %v170 = vld [vmem:[%s1 + $0x1bc] sm:$0xf]
    %v171 = vld [vmem:[%s1 + $0x1c0] sm:$0xf]
    %v172 = vld [vmem:[%s1 + $0x1c4] sm:$0xf]
    %v173 = vld [vmem:[%s1 + $0x1c8] sm:$0xf]
    %v174 = vld [vmem:[%s1 + $0x1cc] sm:$0xf]
    %v175 = vld [vmem:[%s1 + $0x1d0] sm:$0xf]
    %v176 = vld [vmem:[%s1 + $0x1d4] sm:$0xf]
    %v177 = vld [vmem:[%s1 + $0x1d8] sm:$0xf]
    %v178 = vld [vmem:[%s1 + $0x1dc] sm:$0xf]
    %v179 = vld [vmem:[%s1 + $0x1e0] sm:$0xf]
    %v180 = vld [vmem:[%s1 + $0x1e4] sm:$0xf]
    %v181 = vld [vmem:[%s1 + $0x1e8] sm:$0xf]
    %v182 = vld [vmem:[%s1 + $0x1ec] sm:$0xf]
    %v183 = vld [vmem:[%s1 + $0x1f0] sm:$0xf]
    %v184 = vld [vmem:[%s1 + $0x1f4] sm:$0xf]
    %v185 = vld [vmem:[%s1 + $0x1f8] sm:$0xf]
    %v186 = vld [vmem:[%s1 + $0x1fc] sm:$0xf]
    %v195 = vunpack.c.l.b16 %v51
    %v196 = vunpack.c.h.b16 %v51
    %v197 = vunpack.c.l.b16 %v52
    %v198 = vunpack.c.h.b16 %v52
    %v199 = vunpack.c.l.b16 %v53
    %v200 = vunpack.c.h.b16 %v53
    %v201 = vunpack.c.l.b16 %v54
    %v202 = vunpack.c.h.b16 %v54
    %v203 = vunpack.c.l.b16 %v55
    %v204 = vunpack.c.h.b16 %v55
    %v205 = vunpack.c.l.b16 %v56
    %v206 = vunpack.c.h.b16 %v56
    %v207 = vunpack.c.l.b16 %v57
    %v208 = vunpack.c.h.b16 %v57
    %v209 = vunpack.c.l.b16 %v58
    %v210 = vunpack.c.h.b16 %v58
    %v211 = vpack.c.b16 %v203, %v195
    %v212 = vpack.c.b16 %v204, %v196
    %v213 = vpack.c.b16 %v205, %v197
    %v214 = vpack.c.b16 %v206, %v198
    %v215 = vpack.c.b16 %v207, %v199
    %v216 = vpack.c.b16 %v208, %v200
    %v217 = vpack.c.b16 %v209, %v201
    %v218 = vpack.c.b16 %v210, %v202
    %v355 = vunpack.c.l.b16 %v59
    %v356 = vunpack.c.l.b16 %v60
    %v357 = vunpack.c.l.b16 %v61
    %v358 = vunpack.c.l.b16 %v62
    %v359 = vunpack.c.l.b16 %v63
    %v360 = vunpack.c.l.b16 %v64
    %v361 = vunpack.c.l.b16 %v65
    %v362 = vunpack.c.l.b16 %v66
    %v363 = vunpack.c.l.b16 %v67
    %v364 = vunpack.c.l.b16 %v68
    %v365 = vunpack.c.l.b16 %v69
    %v366 = vunpack.c.l.b16 %v70
    %v367 = vunpack.c.l.b16 %v71
    %v368 = vunpack.c.l.b16 %v72
    %v369 = vunpack.c.l.b16 %v73
    %v370 = vunpack.c.l.b16 %v74
    %v371 = vunpack.c.l.b16 %v75
    %v372 = vunpack.c.l.b16 %v76
    %v373 = vunpack.c.l.b16 %v77
    %v374 = vunpack.c.l.b16 %v78
    %v375 = vunpack.c.l.b16 %v79
    %v376 = vunpack.c.l.b16 %v80
    %v377 = vunpack.c.l.b16 %v81
    %v378 = vunpack.c.l.b16 %v82
    %v379 = vunpack.c.l.b16 %v83
    %v380 = vunpack.c.l.b16 %v84
    %v381 = vunpack.c.l.b16 %v85
    %v382 = vunpack.c.l.b16 %v86
    %v383 = vunpack.c.l.b16 %v87
    %v384 = vunpack.c.l.b16 %v88
    %v385 = vunpack.c.l.b16 %v89
    %v386 = vunpack.c.l.b16 %v90
    %v387 = vunpack.c.l.b16 %v91
    %v388 = vunpack.c.l.b16 %v92
    %v389 = vunpack.c.l.b16 %v93
    %v390 = vunpack.c.l.b16 %v94
    %v391 = vunpack.c.l.b16 %v95
    %v392 = vunpack.c.l.b16 %v96
    %v393 = vunpack.c.l.b16 %v97
    %v394 = vunpack.c.l.b16 %v98
    %v395 = vunpack.c.l.b16 %v99
    %v396 = vunpack.c.l.b16 %v100
    %v397 = vunpack.c.l.b16 %v101
    %v398 = vunpack.c.l.b16 %v102
    %v399 = vunpack.c.l.b16 %v103
    %v400 = vunpack.c.l.b16 %v104
    %v401 = vunpack.c.l.b16 %v105
    %v402 = vunpack.c.l.b16 %v106
    %v403 = vunpack.c.l.b16 %v107
    %v404 = vunpack.c.l.b16 %v108
    %v405 = vunpack.c.l.b16 %v109
    %v406 = vunpack.c.l.b16 %v110
    %v407 = vunpack.c.l.b16 %v111
    %v408 = vunpack.c.l.b16 %v112
    %v409 = vunpack.c.l.b16 %v113
    %v410 = vunpack.c.l.b16 %v114
    %v411 = vunpack.c.l.b16 %v115
    %v412 = vunpack.c.l.b16 %v116
    %v413 = vunpack.c.l.b16 %v117
    %v414 = vunpack.c.l.b16 %v118
    %v415 = vunpack.c.l.b16 %v119
    %v416 = vunpack.c.l.b16 %v120
    %v417 = vunpack.c.l.b16 %v121
    %v418 = vunpack.c.l.b16 %v122
    %v419 = vunpack.c.l.b16 %v123
    %v420 = vunpack.c.l.b16 %v124
    %v421 = vunpack.c.l.b16 %v125
    %v422 = vunpack.c.l.b16 %v126
    %v423 = vunpack.c.l.b16 %v127
    %v424 = vunpack.c.l.b16 %v128
    %v425 = vunpack.c.l.b16 %v129
    %v426 = vunpack.c.l.b16 %v130
    %v427 = vunpack.c.l.b16 %v131
    %v428 = vunpack.c.l.b16 %v132
    %v429 = vunpack.c.l.b16 %v133
    %v430 = vunpack.c.l.b16 %v134
    %v431 = vunpack.c.l.b16 %v135
    %v432 = vunpack.c.l.b16 %v136
    %v433 = vunpack.c.l.b16 %v137
    %v434 = vunpack.c.l.b16 %v138
    %v435 = vunpack.c.l.b16 %v139
    %v436 = vunpack.c.l.b16 %v140
    %v437 = vunpack.c.l.b16 %v141
    %v438 = vunpack.c.l.b16 %v142
    %v439 = vunpack.c.l.b16 %v143
    %v440 = vunpack.c.l.b16 %v144
    %v441 = vunpack.c.l.b16 %v145
    %v442 = vunpack.c.l.b16 %v146
    %v443 = vunpack.c.l.b16 %v147
    %v444 = vunpack.c.l.b16 %v148
    %v445 = vunpack.c.l.b16 %v149
    %v446 = vunpack.c.l.b16 %v150
    %v447 = vunpack.c.l.b16 %v151
    %v448 = vunpack.c.l.b16 %v152
    %v449 = vunpack.c.l.b16 %v153
    %v450 = vunpack.c.l.b16 %v154
    %v451 = vunpack.c.l.b16 %v155
    %v452 = vunpack.c.l.b16 %v156
    %v453 = vunpack.c.l.b16 %v157
    %v454 = vunpack.c.l.b16 %v158
    %v455 = vunpack.c.l.b16 %v159
    %v456 = vunpack.c.l.b16 %v160
    %v457 = vunpack.c.l.b16 %v161
    %v458 = vunpack.c.l.b16 %v162
    %v459 = vunpack.c.l.b16 %v163
    %v460 = vunpack.c.l.b16 %v164
    %v461 = vunpack.c.l.b16 %v165
    %v462 = vunpack.c.l.b16 %v166
    %v463 = vunpack.c.l.b16 %v167
    %v464 = vunpack.c.l.b16 %v168
    %v465 = vunpack.c.l.b16 %v169
    %v466 = vunpack.c.l.b16 %v170
    %v467 = vunpack.c.l.b16 %v171
    %v468 = vunpack.c.l.b16 %v172
    %v469 = vunpack.c.l.b16 %v173
    %v470 = vunpack.c.l.b16 %v174
    %v471 = vunpack.c.l.b16 %v175
    %v472 = vunpack.c.l.b16 %v176
    %v473 = vunpack.c.l.b16 %v177
    %v474 = vunpack.c.l.b16 %v178
    %v475 = vunpack.c.l.b16 %v179
    %v476 = vunpack.c.l.b16 %v180
    %v477 = vunpack.c.l.b16 %v181
    %v478 = vunpack.c.l.b16 %v182
    %v479 = vunpack.c.l.b16 %v183
    %v480 = vunpack.c.l.b16 %v184
    %v481 = vunpack.c.l.b16 %v185
    %v482 = vunpack.c.l.b16 %v186
    %v483 = vpack.c.b16 %v356, %v355
    %v484 = vpack.c.b16 %v358, %v357
    %v485 = vpack.c.b16 %v360, %v359
    %v486 = vpack.c.b16 %v362, %v361
    %v487 = vpack.c.b16 %v364, %v363
    %v488 = vpack.c.b16 %v366, %v365
    %v489 = vpack.c.b16 %v368, %v367
    %v490 = vpack.c.b16 %v370, %v369
    %v491 = vpack.c.b16 %v372, %v371
    %v492 = vpack.c.b16 %v374, %v373
    %v493 = vpack.c.b16 %v376, %v375
    %v494 = vpack.c.b16 %v378, %v377
    %v495 = vpack.c.b16 %v380, %v379
    %v496 = vpack.c.b16 %v382, %v381
    %v497 = vpack.c.b16 %v384, %v383
    %v498 = vpack.c.b16 %v386, %v385
    %v499 = vpack.c.b16 %v388, %v387
    %v500 = vpack.c.b16 %v390, %v389
    %v501 = vpack.c.b16 %v392, %v391
    %v502 = vpack.c.b16 %v394, %v393
    %v503 = vpack.c.b16 %v396, %v395
    %v504 = vpack.c.b16 %v398, %v397
    %v505 = vpack.c.b16 %v400, %v399
    %v506 = vpack.c.b16 %v402, %v401
    %v507 = vpack.c.b16 %v404, %v403
    %v508 = vpack.c.b16 %v406, %v405
    %v509 = vpack.c.b16 %v408, %v407
    %v510 = vpack.c.b16 %v410, %v409
    %v511 = vpack.c.b16 %v412, %v411
    %v512 = vpack.c.b16 %v414, %v413
    %v513 = vpack.c.b16 %v416, %v415
    %v514 = vpack.c.b16 %v418, %v417
    %v515 = vpack.c.b16 %v420, %v419
    %v516 = vpack.c.b16 %v422, %v421
    %v517 = vpack.c.b16 %v424, %v423
    %v518 = vpack.c.b16 %v426, %v425
    %v519 = vpack.c.b16 %v428, %v427
    %v520 = vpack.c.b16 %v430, %v429
    %v521 = vpack.c.b16 %v432, %v431
    %v522 = vpack.c.b16 %v434, %v433
    %v523 = vpack.c.b16 %v436, %v435
    %v524 = vpack.c.b16 %v438, %v437
    %v525 = vpack.c.b16 %v440, %v439
    %v526 = vpack.c.b16 %v442, %v441
    %v527 = vpack.c.b16 %v444, %v443
    %v528 = vpack.c.b16 %v446, %v445
    %v529 = vpack.c.b16 %v448, %v447
    %v530 = vpack.c.b16 %v450, %v449
    %v531 = vpack.c.b16 %v452, %v451
    %v532 = vpack.c.b16 %v454, %v453
    %v533 = vpack.c.b16 %v456, %v455
    %v534 = vpack.c.b16 %v458, %v457
    %v535 = vpack.c.b16 %v460, %v459
    %v536 = vpack.c.b16 %v462, %v461
    %v537 = vpack.c.b16 %v464, %v463
    %v538 = vpack.c.b16 %v466, %v465
    %v539 = vpack.c.b16 %v468, %v467
    %v540 = vpack.c.b16 %v470, %v469
    %v541 = vpack.c.b16 %v472, %v471
    %v542 = vpack.c.b16 %v474, %v473
    %v543 = vpack.c.b16 %v476, %v475
    %v544 = vpack.c.b16 %v478, %v477
    %v545 = vpack.c.b16 %v480, %v479
    %v546 = vpack.c.b16 %v482, %v481
    %611 = vmatprep.subr.bf16.mxu0 0
    %612 = vmatpush1.bf16.msra.mxu0 %v483
    %613 = vmatprep.subr.bf16.mxu0 0
    %614 = vmatpush1.bf16.msra.mxu0 %v484
    %615 = vmatprep.subr.bf16.mxu0 0
    %616 = vmatpush1.bf16.msra.mxu0 %v485
    %617 = vmatprep.subr.bf16.mxu0 0
    %618 = vmatpush1.bf16.msra.mxu0 %v486
    %619 = vmatprep.subr.bf16.mxu0 0
    %620 = vmatpush1.bf16.msra.mxu0 %v487
    %621 = vmatprep.subr.bf16.mxu0 0
    %622 = vmatpush1.bf16.msra.mxu0 %v488
    %623 = vmatprep.subr.bf16.mxu0 0
    %624 = vmatpush1.bf16.msra.mxu0 %v489
    %625 = vmatprep.subr.bf16.mxu0 0
    %626 = vmatpush1.bf16.msra.mxu0 %v490
    %627 = vmatprep.subr.bf16.mxu0 0
    %628 = vmatpush1.bf16.msra.mxu0 %v491
    %629 = vmatprep.subr.bf16.mxu0 0
    %630 = vmatpush1.bf16.msra.mxu0 %v492
    %631 = vmatprep.subr.bf16.mxu0 0
    %632 = vmatpush1.bf16.msra.mxu0 %v493
    %633 = vmatprep.subr.bf16.mxu0 0
    %634 = vmatpush1.bf16.msra.mxu0 %v494
    %635 = vmatprep.subr.bf16.mxu0 0
    %636 = vmatpush1.bf16.msra.mxu0 %v495
    %637 = vmatprep.subr.bf16.mxu0 0
    %638 = vmatpush1.bf16.msra.mxu0 %v496
    %639 = vmatprep.subr.bf16.mxu0 0
    %640 = vmatpush1.bf16.msra.mxu0 %v497
    %641 = vmatprep.subr.bf16.mxu0 0
    %642 = vmatpush1.bf16.msra.mxu0 %v498
    %643 = vmatprep.mubr.bf16.mxu0 %v212
    %644 = vmatmul.mubr.bf16.gmra.mrb[0].mxu0 %v211
    %v645 = vpop.f32.mrb[0].mxu0
    %v646 = vadd.f32 0.0, %v645
    %v647 = vpop.f32.mrb[0].mxu0
    %v648 = vpop.f32.mrb[0].mxu0
    %v649 = vadd.f32 0.0, %v648
    %v650 = vpop.f32.mrb[0].mxu0
    %651 = vdwg.mxu0
    %652 = vmatprep.subr.bf16.mxu0 0
    %653 = vmatpush1.bf16.msra.mxu0 %v499
    %654 = vmatprep.subr.bf16.mxu0 0
    %655 = vmatpush1.bf16.msra.mxu0 %v500
    %656 = vmatprep.subr.bf16.mxu0 0
    %657 = vmatpush1.bf16.msra.mxu0 %v501
    %658 = vmatprep.subr.bf16.mxu0 0
    %659 = vmatpush1.bf16.msra.mxu0 %v502
    %660 = vmatprep.subr.bf16.mxu0 0
    %661 = vmatpush1.bf16.msra.mxu0 %v503
    %662 = vmatprep.subr.bf16.mxu0 0
    %663 = vmatpush1.bf16.msra.mxu0 %v504
    %664 = vmatprep.subr.bf16.mxu0 0
    %665 = vmatpush1.bf16.msra.mxu0 %v505
    %666 = vmatprep.subr.bf16.mxu0 0
    %667 = vmatpush1.bf16.msra.mxu0 %v506
    %668 = vmatprep.subr.bf16.mxu0 0
    %669 = vmatpush1.bf16.msra.mxu0 %v507
    %670 = vmatprep.subr.bf16.mxu0 0
    %671 = vmatpush1.bf16.msra.mxu0 %v508
    %672 = vmatprep.subr.bf16.mxu0 0
    %673 = vmatpush1.bf16.msra.mxu0 %v509
    %674 = vmatprep.subr.bf16.mxu0 0
    %675 = vmatpush1.bf16.msra.mxu0 %v510
    %676 = vmatprep.subr.bf16.mxu0 0
    %677 = vmatpush1.bf16.msra.mxu0 %v511
    %678 = vmatprep.subr.bf16.mxu0 0
    %679 = vmatpush1.bf16.msra.mxu0 %v512
    %680 = vmatprep.subr.bf16.mxu0 0
    %681 = vmatpush1.bf16.msra.mxu0 %v513
    %682 = vmatprep.subr.bf16.mxu0 0
    %683 = vmatpush1.bf16.msra.mxu0 %v514
    %684 = vmatprep.mubr.bf16.mxu0 %v214
    %685 = vmatmul.mubr.bf16.gmra.mrb[0].mxu0 %v213
    %v686 = vpop.f32.mrb[0].mxu0
    %v687 = vadd.f32 %v646, %v686
    %v688 = vpop.f32.mrb[0].mxu0
    %v689 = vpop.f32.mrb[0].mxu0
    %v690 = vadd.f32 %v649, %v689
    %v691 = vpop.f32.mrb[0].mxu0
    %692 = vdwg.mxu0
    %693 = vmatprep.subr.bf16.mxu0 0
    %694 = vmatpush1.bf16.msra.mxu0 %v515
    %695 = vmatprep.subr.bf16.mxu0 0
    %696 = vmatpush1.bf16.msra.mxu0 %v516
    %697 = vmatprep.subr.bf16.mxu0 0
    %698 = vmatpush1.bf16.msra.mxu0 %v517
    %699 = vmatprep.subr.bf16.mxu0 0
    %700 = vmatpush1.bf16.msra.mxu0 %v518
    %701 = vmatprep.subr.bf16.mxu0 0
    %702 = vmatpush1.bf16.msra.mxu0 %v519
    %703 = vmatprep.subr.bf16.mxu0 0
    %704 = vmatpush1.bf16.msra.mxu0 %v520
    %705 = vmatprep.subr.bf16.mxu0 0
    %706 = vmatpush1.bf16.msra.mxu0 %v521
    %707 = vmatprep.subr.bf16.mxu0 0
    %708 = vmatpush1.bf16.msra.mxu0 %v522
    %709 = vmatprep.subr.bf16.mxu0 0
    %710 = vmatpush1.bf16.msra.mxu0 %v523
    %711 = vmatprep.subr.bf16.mxu0 0
    %712 = vmatpush1.bf16.msra.mxu0 %v524
    %713 = vmatprep.subr.bf16.mxu0 0
    %714 = vmatpush1.bf16.msra.mxu0 %v525
    %715 = vmatprep.subr.bf16.mxu0 0
    %716 = vmatpush1.bf16.msra.mxu0 %v526
    %717 = vmatprep.subr.bf16.mxu0 0
    %718 = vmatpush1.bf16.msra.mxu0 %v527
    %719 = vmatprep.subr.bf16.mxu0 0
    %720 = vmatpush1.bf16.msra.mxu0 %v528
    %721 = vmatprep.subr.bf16.mxu0 0
    %722 = vmatpush1.bf16.msra.mxu0 %v529
    %723 = vmatprep.subr.bf16.mxu0 0
    %724 = vmatpush1.bf16.msra.mxu0 %v530
    %725 = vmatprep.mubr.bf16.mxu0 %v216
    %726 = vmatmul.mubr.bf16.gmra.mrb[0].mxu0 %v215
    %v727 = vpop.f32.mrb[0].mxu0
    %v728 = vadd.f32 %v687, %v727
    %v729 = vpop.f32.mrb[0].mxu0
    %v730 = vpop.f32.mrb[0].mxu0
    %v731 = vadd.f32 %v690, %v730
    %v732 = vpop.f32.mrb[0].mxu0
    %733 = vdwg.mxu0
    %734 = vmatprep.subr.bf16.mxu0 0
    %735 = vmatpush1.bf16.msra.mxu0 %v531
    %736 = vmatprep.subr.bf16.mxu0 0
    %737 = vmatpush1.bf16.msra.mxu0 %v532
    %738 = vmatprep.subr.bf16.mxu0 0
    %739 = vmatpush1.bf16.msra.mxu0 %v533
    %740 = vmatprep.subr.bf16.mxu0 0
    %741 = vmatpush1.bf16.msra.mxu0 %v534
    %742 = vmatprep.subr.bf16.mxu0 0
    %743 = vmatpush1.bf16.msra.mxu0 %v535
    %744 = vmatprep.subr.bf16.mxu0 0
    %745 = vmatpush1.bf16.msra.mxu0 %v536
    %746 = vmatprep.subr.bf16.mxu0 0
    %747 = vmatpush1.bf16.msra.mxu0 %v537
    %748 = vmatprep.subr.bf16.mxu0 0
    %749 = vmatpush1.bf16.msra.mxu0 %v538
    %750 = vmatprep.subr.bf16.mxu0 0
    %751 = vmatpush1.bf16.msra.mxu0 %v539
    %752 = vmatprep.subr.bf16.mxu0 0
    %753 = vmatpush1.bf16.msra.mxu0 %v540
    %754 = vmatprep.subr.bf16.mxu0 0
    %755 = vmatpush1.bf16.msra.mxu0 %v541
    %756 = vmatprep.subr.bf16.mxu0 0
    %757 = vmatpush1.bf16.msra.mxu0 %v542
    %758 = vmatprep.subr.bf16.mxu0 0
    %759 = vmatpush1.bf16.msra.mxu0 %v543
    %760 = vmatprep.subr.bf16.mxu0 0
    %761 = vmatpush1.bf16.msra.mxu0 %v544
    %762 = vmatprep.subr.bf16.mxu0 0
    %763 = vmatpush1.bf16.msra.mxu0 %v545
    %764 = vmatprep.subr.bf16.mxu0 0
    %765 = vmatpush1.bf16.msra.mxu0 %v546
    %766 = vmatprep.mubr.bf16.mxu0 %v218
    %767 = vmatmul.mubr.bf16.gmra.mrb[0].mxu0 %v217
    %v768 = vpop.f32.mrb[0].mxu0
    %v769 = vadd.f32 %v728, %v768
    %v770 = vpop.f32.mrb[0].mxu0
    %v771 = vpop.f32.mrb[0].mxu0
    %v772 = vadd.f32 %v731, %v771
    %v773 = vpop.f32.mrb[0].mxu0
    %774 = vdwg.mxu0
    %v775 = vadd.f32 %v49, %v769
    %v776 = vadd.f32 %v50, %v772
    %777 = vst [vmem:[#allocation2] sm:$0xff] %v775
    %778 = vst [vmem:[#allocation2 + $0x8] sm:$0xff] %v776
    // Predicated region
    $region54: #{vicreg_forward.1} parent=1 // pred_check
      %p779 = pneg %p43
    $region55: #{vicreg_forward.1} parent=1 // pred_check_branch
      %781 = sbr.rel (%p779) target = $region57
    $region56: #{vicreg_forward.1} parent=1 // pred_region
      %v782 = vld [vmem:[#allocation2] sm:$0xff]
      %v783 = vld [vmem:[#allocation2 + $0x8] sm:$0xff]
      %v784 = vld [vmem:[%s2] sm:$0x1]
      %v786 = vlaneseq
      %v787 = vshrl.u32 %v786, 7
      %v788 = vsub.s32 0, %v787
      %v789 = vrot.slane %v784, %v788
      %v791 = vadd.f32 %v782, %v789
      %v792 = vadd.f32 %v783, %v789
      %v793 = vmax.f32 %v791, 0.0
      %v794 = vmax.f32 %v792, 0.0
      %v795 = vld [vmem:[%s3] sm:$0xf]
      %v796 = vld [vmem:[%s3 + $0x4] sm:$0xf]
      %v797 = vld [vmem:[%s3 + $0x8] sm:$0xf]
      %v798 = vld [vmem:[%s3 + $0xc] sm:$0xf]
      %v799 = vld [vmem:[%s3 + $0x10] sm:$0xf]
      %v800 = vld [vmem:[%s3 + $0x14] sm:$0xf]
      %v801 = vld [vmem:[%s3 + $0x18] sm:$0xf]
      %v802 = vld [vmem:[%s3 + $0x1c] sm:$0xf]
      %v803 = vld [vmem:[%s3 + $0x20] sm:$0xf]
      %v804 = vld [vmem:[%s3 + $0x24] sm:$0xf]
      %v805 = vld [vmem:[%s3 + $0x28] sm:$0xf]
      %v806 = vld [vmem:[%s3 + $0x2c] sm:$0xf]
      %v807 = vld [vmem:[%s3 + $0x30] sm:$0xf]
      %v808 = vld [vmem:[%s3 + $0x34] sm:$0xf]
      %v809 = vld [vmem:[%s3 + $0x38] sm:$0xf]
      %v810 = vld [vmem:[%s3 + $0x3c] sm:$0xf]
      %v811 = vld [vmem:[%s4] sm:$0x1]
      %v812 = vld [vmem:[%s5] sm:$0x1]
      %v813 = vld [vmem:[%s6] sm:$0x1]
      %v814 = vpack.c.bf16 %v793, %v793
      %v816 = vlaneseq
      %v817 = vshrl.u32 %v816, 7
      %v818 = vsub.s32 0, %v817
      %v819 = vrot.slane %v811, %v818
      %v837 = vunpack.c.l.b16 %v795
      %v838 = vunpack.c.l.b16 %v796
      %v839 = vunpack.c.l.b16 %v797
      %v840 = vunpack.c.l.b16 %v798
      %v841 = vunpack.c.l.b16 %v799
      %v842 = vunpack.c.l.b16 %v800
      %v843 = vunpack.c.l.b16 %v801
      %v844 = vunpack.c.l.b16 %v802
      %v845 = vunpack.c.l.b16 %v803
      %v846 = vunpack.c.l.b16 %v804
      %v847 = vunpack.c.l.b16 %v805
      %v848 = vunpack.c.l.b16 %v806
      %v849 = vunpack.c.l.b16 %v807
      %v850 = vunpack.c.l.b16 %v808
      %v851 = vunpack.c.l.b16 %v809
      %v852 = vunpack.c.l.b16 %v810
      %v853 = vpack.c.b16 %v838, %v837
      %v854 = vpack.c.b16 %v840, %v839
      %v855 = vpack.c.b16 %v842, %v841
      %v856 = vpack.c.b16 %v844, %v843
      %v857 = vpack.c.b16 %v846, %v845
      %v858 = vpack.c.b16 %v848, %v847
      %v859 = vpack.c.b16 %v850, %v849
      %v860 = vpack.c.b16 %v852, %v851
      %869 = vmatprep.subr.bf16.mxu0 0
      %870 = vmatpush1.bf16.msra.mxu0 %v853
      %871 = vmatprep.subr.bf16.mxu0 0
      %872 = vmatpush1.bf16.msra.mxu0 %v854
      %873 = vmatprep.subr.bf16.mxu0 0
      %874 = vmatpush1.bf16.msra.mxu0 %v855
      %875 = vmatprep.subr.bf16.mxu0 0
      %876 = vmatpush1.bf16.msra.mxu0 %v856
      %877 = vmatprep.subr.bf16.mxu0 0
      %878 = vmatpush1.bf16.msra.mxu0 %v857
      %879 = vmatprep.subr.bf16.mxu0 0
      %880 = vmatpush1.bf16.msra.mxu0 %v858
      %881 = vmatprep.subr.bf16.mxu0 0
      %882 = vmatpush1.bf16.msra.mxu0 %v859
      %883 = vmatprep.subr.bf16.mxu0 0
      %884 = vmatpush1.bf16.msra.mxu0 %v860
      %885 = vmatprep.subr.bf16.mxu0 0
      %886 = vmatpush1.bf16.msra.mxu0 0
      %887 = vmatprep.subr.bf16.mxu0 0
      %888 = vmatpush1.bf16.msra.mxu0 0
      %889 = vmatprep.subr.bf16.mxu0 0
      %890 = vmatpush1.bf16.msra.mxu0 0
      %891 = vmatprep.subr.bf16.mxu0 0
      %892 = vmatpush1.bf16.msra.mxu0 0
      %893 = vmatprep.subr.bf16.mxu0 0
      %894 = vmatpush1.bf16.msra.mxu0 0
      %895 = vmatprep.subr.bf16.mxu0 0
      %896 = vmatpush1.bf16.msra.mxu0 0
      %897 = vmatprep.subr.bf16.mxu0 0
      %898 = vmatpush1.bf16.msra.mxu0 0
      %899 = vmatprep.subr.bf16.mxu0 0
      %900 = vmatpush1.bf16.msra.mxu0 0
      %901 = vmatprep.mubr.bf16.mxu0 0
      %902 = vmatmul.mubr.bf16.gmra.mrb[0].mxu0 %v814
      %v903 = vpop.f32.mrb[0].mxu0
      %v904 = vadd.f32 %v819, %v903
      %v905 = vpop.f32.mrb[0].mxu0
      %v906 = vpop.f32.mrb[0].mxu0
      %v907 = vpop.f32.mrb[0].mxu0
      %908 = vdwg.mxu0
      %v909 = vrot.slane %v904, 4
      %v910 = vadd.f32 %v904, %v909
      %v911 = vrot.slane %v910, 2
      %v912 = vadd.f32 %v910, %v911
      %v913 = vrot.slane %v912, 1
      %v914 = vadd.f32 %v912, %v913
      %v915 = vrcp.pop 8.0
      %v916 = vmul.f32 %v914, %v915
      %v917 = vsub.f32 %v904, %v916
      %v918 = vmul.f32 %v917, %v917
      %v919 = vrot.slane %v918, 4
      %v920 = vadd.f32 %v918, %v919
      %v921 = vrot.slane %v920, 2
      %v922 = vadd.f32 %v920, %v921
      %v923 = vrot.slane %v922, 1
      %v924 = vadd.f32 %v922, %v923
      %v925 = vmul.f32 %v924, %v915
      %v926 = vadd.f32 %v925, 1e-05
      %v927 = vrsqrt.pop %v926
      %v928 = vmul.f32 %v917, %v927
      %v930 = vlaneseq
      %v931 = vshrl.u32 %v930, 7
      %v932 = vsub.s32 0, %v931
      %v933 = vrot.slane %v812, %v932
      %v935 = vmul.f32 %v928, %v933
      %v937 = vlaneseq
      %v938 = vshrl.u32 %v937, 7
      %v939 = vsub.s32 0, %v938
      %v940 = vrot.slane %v813, %v939
      %v942 = vadd.f32 %v935, %v940
      %v943 = vmax.f32 %v942, 0.0
      %v944 = vpack.c.bf16 %v794, %v794
      %945 = vmatprep.subr.bf16.mxu0 0
      %946 = vmatpush1.bf16.msra.mxu0 %v853
      %947 = vmatprep.subr.bf16.mxu0 0
      %948 = vmatpush1.bf16.msra.mxu0 %v854
      %949 = vmatprep.subr.bf16.mxu0 0
      %950 = vmatpush1.bf16.msra.mxu0 %v855
      %951 = vmatprep.subr.bf16.mxu0 0
      %952 = vmatpush1.bf16.msra.mxu0 %v856
      %953 = vmatprep.subr.bf16.mxu0 0
      %954 = vmatpush1.bf16.msra.mxu0 %v857
      %955 = vmatprep.subr.bf16.mxu0 0
      %956 = vmatpush1.bf16.msra.mxu0 %v858
      %957 = vmatprep.subr.bf16.mxu0 0
      %958 = vmatpush1.bf16.msra.mxu0 %v859
      %959 = vmatprep.subr.bf16.mxu0 0
      %960 = vmatpush1.bf16.msra.mxu0 %v860
      %961 = vmatprep.subr.bf16.mxu0 0
      %962 = vmatpush1.bf16.msra.mxu0 0
      %963 = vmatprep.subr.bf16.mxu0 0
      %964 = vmatpush1.bf16.msra.mxu0 0
      %965 = vmatprep.subr.bf16.mxu0 0
      %966 = vmatpush1.bf16.msra.mxu0 0
      %967 = vmatprep.subr.bf16.mxu0 0
      %968 = vmatpush1.bf16.msra.mxu0 0
      %969 = vmatprep.subr.bf16.mxu0 0
      %970 = vmatpush1.bf16.msra.mxu0 0
      %971 = vmatprep.subr.bf16.mxu0 0
      %972 = vmatpush1.bf16.msra.mxu0 0
      %973 = vmatprep.subr.bf16.mxu0 0
      %974 = vmatpush1.bf16.msra.mxu0 0
      %975 = vmatprep.subr.bf16.mxu0 0
      %976 = vmatpush1.bf16.msra.mxu0 0
      %977 = vmatprep.mubr.bf16.mxu0 0
      %978 = vmatmul.mubr.bf16.gmra.mrb[0].mxu0 %v944
      %v979 = vpop.f32.mrb[0].mxu0
      %v980 = vadd.f32 %v819, %v979
      %v981 = vpop.f32.mrb[0].mxu0
      %v982 = vpop.f32.mrb[0].mxu0
      %v983 = vpop.f32.mrb[0].mxu0
      %984 = vdwg.mxu0
      %v985 = vrot.slane %v980, 4
      %v986 = vadd.f32 %v980, %v985
      %v987 = vrot.slane %v986, 2
      %v988 = vadd.f32 %v986, %v987
      %v989 = vrot.slane %v988, 1
      %v990 = vadd.f32 %v988, %v989
      %v991 = vmul.f32 %v990, %v915
      %v992 = vsub.f32 %v980, %v991
      %v993 = vmul.f32 %v992, %v992
      %v994 = vrot.slane %v993, 4
      %v995 = vadd.f32 %v993, %v994
      %v996 = vrot.slane %v995, 2
      %v997 = vadd.f32 %v995, %v996
      %v998 = vrot.slane %v997, 1
      %v999 = vadd.f32 %v997, %v998
      %v1000 = vmul.f32 %v999, %v915
      %v1001 = vadd.f32 %v1000, 1e-05
      %v1002 = vrsqrt.pop %v1001
      %v1003 = vmul.f32 %v992, %v1002
      %v1004 = vmul.f32 %v1003, %v933
      %v1005 = vadd.f32 %v1004, %v940
      %v1006 = vmax.f32 %v1005, 0.0
      %v1007 = vld [vmem:[%s7] sm:$0xf]
      %v1008 = vld [vmem:[%s7 + $0x4] sm:$0xf]
      %v1009 = vld [vmem:[%s7 + $0x8] sm:$0xf]
      %v1010 = vld [vmem:[%s7 + $0xc] sm:$0xf]
      %v1011 = vld [vmem:[%s7 + $0x10] sm:$0xf]
      %v1012 = vld [vmem:[%s7 + $0x14] sm:$0xf]
      %v1013 = vld [vmem:[%s7 + $0x18] sm:$0xf]
      %v1014 = vld [vmem:[%s7 + $0x1c] sm:$0xf]
      %v1015 = vld [vmem:[%s7 + $0x20] sm:$0xf]
      %v1016 = vld [vmem:[%s7 + $0x24] sm:$0xf]
      %v1017 = vld [vmem:[%s7 + $0x28] sm:$0xf]
      %v1018 = vld [vmem:[%s7 + $0x2c] sm:$0xf]
      %v1019 = vld [vmem:[%s7 + $0x30] sm:$0xf]
      %v1020 = vld [vmem:[%s7 + $0x34] sm:$0xf]
      %v1021 = vld [vmem:[%s7 + $0x38] sm:$0xf]
      %v1022 = vld [vmem:[%s7 + $0x3c] sm:$0xf]
      %v1023 = vld [vmem:[%s8] sm:$0x1]
      %v1024 = vld [vmem:[%s9] sm:$0x1]
      %v1025 = vld [vmem:[%s10] sm:$0x1]
      %v1026 = vpack.c.bf16 %v943, %v943
      %v1028 = vlaneseq
      %v1029 = vshrl.u32 %v1028, 7
      %v1030 = vsub.s32 0, %v1029
      %v1031 = vrot.slane %v1023, %v1030
      %v1049 = vunpack.c.l.b16 %v1007
      %v1050 = vunpack.c.l.b16 %v1008
      %v1051 = vunpack.c.l.b16 %v1009
      %v1052 = vunpack.c.l.b16 %v1010
      %v1053 = vunpack.c.l.b16 %v1011
      %v1054 = vunpack.c.l.b16 %v1012
      %v1055 = vunpack.c.l.b16 %v1013
      %v1056 = vunpack.c.l.b16 %v1014
      %v1057 = vunpack.c.l.b16 %v1015
      %v1058 = vunpack.c.l.b16 %v1016
      %v1059 = vunpack.c.l.b16 %v1017
      %v1060 = vunpack.c.l.b16 %v1018
      %v1061 = vunpack.c.l.b16 %v1019
      %v1062 = vunpack.c.l.b16 %v1020
      %v1063 = vunpack.c.l.b16 %v1021
      %v1064 = vunpack.c.l.b16 %v1022
      %v1065 = vpack.c.b16 %v1050, %v1049
      %v1066 = vpack.c.b16 %v1052, %v1051
      %v1067 = vpack.c.b16 %v1054, %v1053
      %v1068 = vpack.c.b16 %v1056, %v1055
      %v1069 = vpack.c.b16 %v1058, %v1057
      %v1070 = vpack.c.b16 %v1060, %v1059
      %v1071 = vpack.c.b16 %v1062, %v1061
      %v1072 = vpack.c.b16 %v1064, %v1063
      %1081 = vmatprep.subr.bf16.mxu0 0
      %1082 = vmatpush1.bf16.msra.mxu0 %v1065
      %1083 = vmatprep.subr.bf16.mxu0 0
      %1084 = vmatpush1.bf16.msra.mxu0 %v1066
      %1085 = vmatprep.subr.bf16.mxu0 0
      %1086 = vmatpush1.bf16.msra.mxu0 %v1067
      %1087 = vmatprep.subr.bf16.mxu0 0
      %1088 = vmatpush1.bf16.msra.mxu0 %v1068
      %1089 = vmatprep.subr.bf16.mxu0 0
      %1090 = vmatpush1.bf16.msra.mxu0 %v1069
      %1091 = vmatprep.subr.bf16.mxu0 0
      %1092 = vmatpush1.bf16.msra.mxu0 %v1070
      %1093 = vmatprep.subr.bf16.mxu0 0
      %1094 = vmatpush1.bf16.msra.mxu0 %v1071
      %1095 = vmatprep.subr.bf16.mxu0 0
      %1096 = vmatpush1.bf16.msra.mxu0 %v1072
      %1097 = vmatprep.subr.bf16.mxu0 0
      %1098 = vmatpush1.bf16.msra.mxu0 0
      %1099 = vmatprep.subr.bf16.mxu0 0
      %1100 = vmatpush1.bf16.msra.mxu0 0
      %1101 = vmatprep.subr.bf16.mxu0 0
      %1102 = vmatpush1.bf16.msra.mxu0 0
      %1103 = vmatprep.subr.bf16.mxu0 0
      %1104 = vmatpush1.bf16.msra.mxu0 0
      %1105 = vmatprep.subr.bf16.mxu0 0
      %1106 = vmatpush1.bf16.msra.mxu0 0
      %1107 = vmatprep.subr.bf16.mxu0 0
      %1108 = vmatpush1.bf16.msra.mxu0 0
      %1109 = vmatprep.subr.bf16.mxu0 0
      %1110 = vmatpush1.bf16.msra.mxu0 0
      %1111 = vmatprep.subr.bf16.mxu0 0
      %1112 = vmatpush1.bf16.msra.mxu0 0
      %1113 = vmatprep.mubr.bf16.mxu0 0
      %1114 = vmatmul.mubr.bf16.gmra.mrb[0].mxu0 %v1026
      %v1115 = vpop.f32.mrb[0].mxu0
      %v1116 = vadd.f32 %v1031, %v1115
      %v1117 = vpop.f32.mrb[0].mxu0
      %v1118 = vpop.f32.mrb[0].mxu0
      %v1119 = vpop.f32.mrb[0].mxu0
      %1120 = vdwg.mxu0
      %v1121 = vrot.slane %v1116, 4
      %v1122 = vadd.f32 %v1116, %v1121
      %v1123 = vrot.slane %v1122, 2
      %v1124 = vadd.f32 %v1122, %v1123
      %v1125 = vrot.slane %v1124, 1
      %v1126 = vadd.f32 %v1124, %v1125
      %v1127 = vmul.f32 %v1126, %v915
      %v1128 = vsub.f32 %v1116, %v1127
      %v1129 = vmul.f32 %v1128, %v1128
      %v1130 = vrot.slane %v1129, 4
      %v1131 = vadd.f32 %v1129, %v1130
      %v1132 = vrot.slane %v1131, 2
      %v1133 = vadd.f32 %v1131, %v1132
      %v1134 = vrot.slane %v1133, 1
      %v1135 = vadd.f32 %v1133, %v1134
      %v1136 = vmul.f32 %v1135, %v915
      %v1137 = vadd.f32 %v1136, 1e-05
      %v1138 = vrsqrt.pop %v1137
      %v1139 = vmul.f32 %v1128, %v1138
      %v1141 = vlaneseq
      %v1142 = vshrl.u32 %v1141, 7
      %v1143 = vsub.s32 0, %v1142
      %v1144 = vrot.slane %v1024, %v1143
      %v1146 = vmul.f32 %v1139, %v1144
      %v1148 = vlaneseq
      %v1149 = vshrl.u32 %v1148, 7
      %v1150 = vsub.s32 0, %v1149
      %v1151 = vrot.slane %v1025, %v1150
      %v1153 = vadd.f32 %v1146, %v1151
      %v1154 = vmax.f32 %v1153, 0.0
      %v1155 = vpack.c.bf16 %v1006, %v1006
      %1156 = vmatprep.subr.bf16.mxu0 0
      %1157 = vmatpush1.bf16.msra.mxu0 %v1065
      %1158 = vmatprep.subr.bf16.mxu0 0
      %1159 = vmatpush1.bf16.msra.mxu0 %v1066
      %1160 = vmatprep.subr.bf16.mxu0 0
      %1161 = vmatpush1.bf16.msra.mxu0 %v1067
      %1162 = vmatprep.subr.bf16.mxu0 0
      %1163 = vmatpush1.bf16.msra.mxu0 %v1068
      %1164 = vmatprep.subr.bf16.mxu0 0
      %1165 = vmatpush1.bf16.msra.mxu0 %v1069
      %1166 = vmatprep.subr.bf16.mxu0 0
      %1167 = vmatpush1.bf16.msra.mxu0 %v1070
      %1168 = vmatprep.subr.bf16.mxu0 0
      %1169 = vmatpush1.bf16.msra.mxu0 %v1071
      %1170 = vmatprep.subr.bf16.mxu0 0
      %1171 = vmatpush1.bf16.msra.mxu0 %v1072
      %1172 = vmatprep.subr.bf16.mxu0 0
      %1173 = vmatpush1.bf16.msra.mxu0 0
      %1174 = vmatprep.subr.bf16.mxu0 0
      %1175 = vmatpush1.bf16.msra.mxu0 0
      %1176 = vmatprep.subr.bf16.mxu0 0
      %1177 = vmatpush1.bf16.msra.mxu0 0
      %1178 = vmatprep.subr.bf16.mxu0 0
      %1179 = vmatpush1.bf16.msra.mxu0 0
      %1180 = vmatprep.subr.bf16.mxu0 0
      %1181 = vmatpush1.bf16.msra.mxu0 0
      %1182 = vmatprep.subr.bf16.mxu0 0
      %1183 = vmatpush1.bf16.msra.mxu0 0
      %1184 = vmatprep.subr.bf16.mxu0 0
      %1185 = vmatpush1.bf16.msra.mxu0 0
      %1186 = vmatprep.subr.bf16.mxu0 0
      %1187 = vmatpush1.bf16.msra.mxu0 0
      %1188 = vmatprep.mubr.bf16.mxu0 0
      %1189 = vmatmul.mubr.bf16.gmra.mrb[0].mxu0 %v1155
      %v1190 = vpop.f32.mrb[0].mxu0
      %v1191 = vadd.f32 %v1031, %v1190
      %v1192 = vpop.f32.mrb[0].mxu0
      %v1193 = vpop.f32.mrb[0].mxu0
      %v1194 = vpop.f32.mrb[0].mxu0
      %1195 = vdwg.mxu0
      %v1196 = vrot.slane %v1191, 4
      %v1197 = vadd.f32 %v1191, %v1196
      %v1198 = vrot.slane %v1197, 2
      %v1199 = vadd.f32 %v1197, %v1198
      %v1200 = vrot.slane %v1199, 1
      %v1201 = vadd.f32 %v1199, %v1200
      %v1202 = vmul.f32 %v1201, %v915
      %v1203 = vsub.f32 %v1191, %v1202
      %v1204 = vmul.f32 %v1203, %v1203
      %v1205 = vrot.slane %v1204, 4
      %v1206 = vadd.f32 %v1204, %v1205
      %v1207 = vrot.slane %v1206, 2
      %v1208 = vadd.f32 %v1206, %v1207
      %v1209 = vrot.slane %v1208, 1
      %v1210 = vadd.f32 %v1208, %v1209
      %v1211 = vmul.f32 %v1210, %v915
      %v1212 = vadd.f32 %v1211, 1e-05
      %v1213 = vrsqrt.pop %v1212
      %v1214 = vmul.f32 %v1203, %v1213
      %v1215 = vmul.f32 %v1214, %v1144
      %v1216 = vadd.f32 %v1215, %v1151
      %v1217 = vmax.f32 %v1216, 0.0
      %v1218 = vld [vmem:[%s11] sm:$0xf]
      %v1219 = vld [vmem:[%s11 + $0x4] sm:$0xf]
      %v1220 = vld [vmem:[%s11 + $0x8] sm:$0xf]
      %v1221 = vld [vmem:[%s11 + $0xc] sm:$0xf]
      %v1222 = vld [vmem:[%s11 + $0x10] sm:$0xf]
      %v1223 = vld [vmem:[%s11 + $0x14] sm:$0xf]
      %v1224 = vld [vmem:[%s11 + $0x18] sm:$0xf]
      %v1225 = vld [vmem:[%s11 + $0x1c] sm:$0xf]
      %v1226 = vld [vmem:[%s11 + $0x20] sm:$0xf]
      %v1227 = vld [vmem:[%s11 + $0x24] sm:$0xf]
      %v1228 = vld [vmem:[%s11 + $0x28] sm:$0xf]
      %v1229 = vld [vmem:[%s11 + $0x2c] sm:$0xf]
      %v1230 = vld [vmem:[%s11 + $0x30] sm:$0xf]
      %v1231 = vld [vmem:[%s11 + $0x34] sm:$0xf]
      %v1232 = vld [vmem:[%s11 + $0x38] sm:$0xf]
      %v1233 = vld [vmem:[%s11 + $0x3c] sm:$0xf]
      %v1234 = vpack.c.bf16 %v1154, %v1154
      %v1251 = vunpack.c.l.b16 %v1218
      %v1252 = vunpack.c.l.b16 %v1219
      %v1253 = vunpack.c.l.b16 %v1220
      %v1254 = vunpack.c.l.b16 %v1221
      %v1255 = vunpack.c.l.b16 %v1222
      %v1256 = vunpack.c.l.b16 %v1223
      %v1257 = vunpack.c.l.b16 %v1224
      %v1258 = vunpack.c.l.b16 %v1225
      %v1259 = vunpack.c.l.b16 %v1226
      %v1260 = vunpack.c.l.b16 %v1227
      %v1261 = vunpack.c.l.b16 %v1228
      %v1262 = vunpack.c.l.b16 %v1229
      %v1263 = vunpack.c.l.b16 %v1230
      %v1264 = vunpack.c.l.b16 %v1231
      %v1265 = vunpack.c.l.b16 %v1232
      %v1266 = vunpack.c.l.b16 %v1233
      %v1267 = vpack.c.b16 %v1252, %v1251
      %v1268 = vpack.c.b16 %v1254, %v1253
      %v1269 = vpack.c.b16 %v1256, %v1255
      %v1270 = vpack.c.b16 %v1258, %v1257
      %v1271 = vpack.c.b16 %v1260, %v1259
      %v1272 = vpack.c.b16 %v1262, %v1261
      %v1273 = vpack.c.b16 %v1264, %v1263
      %v1274 = vpack.c.b16 %v1266, %v1265
      %1283 = vmatprep.subr.bf16.mxu0 0
      %1284 = vmatpush1.bf16.msra.mxu0 %v1267
      %1285 = vmatprep.subr.bf16.mxu0 0
      %1286 = vmatpush1.bf16.msra.mxu0 %v1268
      %1287 = vmatprep.subr.bf16.mxu0 0
      %1288 = vmatpush1.bf16.msra.mxu0 %v1269
      %1289 = vmatprep.subr.bf16.mxu0 0
      %1290 = vmatpush1.bf16.msra.mxu0 %v1270
      %1291 = vmatprep.subr.bf16.mxu0 0
      %1292 = vmatpush1.bf16.msra.mxu0 %v1271
      %1293 = vmatprep.subr.bf16.mxu0 0
      %1294 = vmatpush1.bf16.msra.mxu0 %v1272
      %1295 = vmatprep.subr.bf16.mxu0 0
      %1296 = vmatpush1.bf16.msra.mxu0 %v1273
      %1297 = vmatprep.subr.bf16.mxu0 0
      %1298 = vmatpush1.bf16.msra.mxu0 %v1274
      %1299 = vmatprep.subr.bf16.mxu0 0
      %1300 = vmatpush1.bf16.msra.mxu0 0
      %1301 = vmatprep.subr.bf16.mxu0 0
      %1302 = vmatpush1.bf16.msra.mxu0 0
      %1303 = vmatprep.subr.bf16.mxu0 0
      %1304 = vmatpush1.bf16.msra.mxu0 0
      %1305 = vmatprep.subr.bf16.mxu0 0
      %1306 = vmatpush1.bf16.msra.mxu0 0
      %1307 = vmatprep.subr.bf16.mxu0 0
      %1308 = vmatpush1.bf16.msra.mxu0 0
      %1309 = vmatprep.subr.bf16.mxu0 0
      %1310 = vmatpush1.bf16.msra.mxu0 0
      %1311 = vmatprep.subr.bf16.mxu0 0
      %1312 = vmatpush1.bf16.msra.mxu0 0
      %1313 = vmatprep.subr.bf16.mxu0 0
      %1314 = vmatpush1.bf16.msra.mxu0 0
      %1315 = vmatprep.mubr.bf16.mxu0 0
      %1316 = vmatmul.mubr.bf16.gmra.mrb[0].mxu0 %v1234
      %v1317 = vpop.f32.mrb[0].mxu0
      %v1318 = vadd.f32 0.0, %v1317
      %v1319 = vpop.f32.mrb[0].mxu0
      %v1320 = vpop.f32.mrb[0].mxu0
      %v1321 = vpop.f32.mrb[0].mxu0
      %1322 = vdwg.mxu0
      %v1323 = vpack.c.bf16 %v1217, %v1217
      %1324 = vmatprep.subr.bf16.mxu0 0
      %1325 = vmatpush1.bf16.msra.mxu0 %v1267
      %1326 = vmatprep.subr.bf16.mxu0 0
      %1327 = vmatpush1.bf16.msra.mxu0 %v1268
      %1328 = vmatprep.subr.bf16.mxu0 0
      %1329 = vmatpush1.bf16.msra.mxu0 %v1269
      %1330 = vmatprep.subr.bf16.mxu0 0
      %1331 = vmatpush1.bf16.msra.mxu0 %v1270
      %1332 = vmatprep.subr.bf16.mxu0 0
      %1333 = vmatpush1.bf16.msra.mxu0 %v1271
      %1334 = vmatprep.subr.bf16.mxu0 0
      %1335 = vmatpush1.bf16.msra.mxu0 %v1272
      %1336 = vmatprep.subr.bf16.mxu0 0
      %1337 = vmatpush1.bf16.msra.mxu0 %v1273
      %1338 = vmatprep.subr.bf16.mxu0 0
      %1339 = vmatpush1.bf16.msra.mxu0 %v1274
      %1340 = vmatprep.subr.bf16.mxu0 0
      %1341 = vmatpush1.bf16.msra.mxu0 0
      %1342 = vmatprep.subr.bf16.mxu0 0
      %1343 = vmatpush1.bf16.msra.mxu0 0
      %1344 = vmatprep.subr.bf16.mxu0 0
      %1345 = vmatpush1.bf16.msra.mxu0 0
      %1346 = vmatprep.subr.bf16.mxu0 0
      %1347 = vmatpush1.bf16.msra.mxu0 0
      %1348 = vmatprep.subr.bf16.mxu0 0
      %1349 = vmatpush1.bf16.msra.mxu0 0
      %1350 = vmatprep.subr.bf16.mxu0 0
      %1351 = vmatpush1.bf16.msra.mxu0 0
      %1352 = vmatprep.subr.bf16.mxu0 0
      %1353 = vmatpush1.bf16.msra.mxu0 0
      %1354 = vmatprep.subr.bf16.mxu0 0
      %1355 = vmatpush1.bf16.msra.mxu0 0
      %1356 = vmatprep.mubr.bf16.mxu0 0
      %1357 = vmatmul.mubr.bf16.gmra.mrb[0].mxu0 %v1323
      %v1358 = vpop.f32.mrb[0].mxu0
      %v1359 = vadd.f32 0.0, %v1358
      %v1360 = vpop.f32.mrb[0].mxu0
      %v1361 = vpop.f32.mrb[0].mxu0
      %v1362 = vpop.f32.mrb[0].mxu0
      %1363 = vdwg.mxu0
      %v1364 = vsub.f32 %v1318, %v1359
      %v1365 = vmul.f32 %v1364, %v1364
      %1366 = vadd.xlane.f32.xlu0 %v1365
      %v1367 = vpop.xlane.xlu0 %1366
      %v1368 = vrot.slane %v1367, 4
      %v1369 = vadd.f32 %v1367, %v1368
      %v1370 = vrot.slane %v1369, 2
      %v1371 = vadd.f32 %v1369, %v1370
      %v1372 = vrot.slane %v1371, 1
      %v1373 = vadd.f32 %v1371, %v1372
      %s1374 = vtos %v1373
      %v1375 = vrcp.pop 1024.0
      %s1376 = vtos %v1375
      %s1377 = smul.f32 %s1374, %s1376
      %v1378 = vrot.slane %v1318, 4
      %v1379 = vadd.f32 %v1318, %v1378
      %v1380 = vrot.slane %v1379, 2
      %v1381 = vadd.f32 %v1379, %v1380
      %v1382 = vrot.slane %v1381, 1
      %v1383 = vadd.f32 %v1381, %v1382
      %v1384 = vmul.f32 %v1383, %v915
      %v1385 = vsub.f32 %v1318, %v1384
      %v1386 = vrot.slane %v1359, 4
      %v1387 = vadd.f32 %v1359, %v1386
      %v1388 = vrot.slane %v1387, 2
      %v1389 = vadd.f32 %v1387, %v1388
      %v1390 = vrot.slane %v1389, 1
      %v1391 = vadd.f32 %v1389, %v1390
      %v1392 = vmul.f32 %v1391, %v915
      %v1393 = vsub.f32 %v1359, %v1392
      %v1394 = vmul.f32 %v1385, %v1385
      %v1395 = vrot.slane %v1394, 4
      %v1396 = vadd.f32 %v1394, %v1395
      %v1397 = vrot.slane %v1396, 2
      %v1398 = vadd.f32 %v1396, %v1397
      %v1399 = vrot.slane %v1398, 1
      %v1400 = vadd.f32 %v1398, %v1399
      %v1401 = vmul.f32 %v1393, %v1393
      %v1402 = vrot.slane %v1401, 4
      %v1403 = vadd.f32 %v1401, %v1402
      %v1404 = vrot.slane %v1403, 2
      %v1405 = vadd.f32 %v1403, %v1404
      %v1406 = vrot.slane %v1405, 1
      %v1407 = vadd.f32 %v1405, %v1406
      %v1408 = vrcp.pop 7.0
      %v1409 = vmul.f32 %v1400, %v1408
      %v1410 = vadd.f32 %v1409, 0.0001
      %v1411 = vrsqrt.pop %v1410
      %v1412 = vmul.f32 %v1410, %v1411
      %vm1413 = vcmp.eq.f32.partialorder %v1410, inf
      %v1414 = vsel %vm1413, %v1410, %v1412
      %vm1415 = vcmp.eq.f32.partialorder %v1410, 0.0
      %v1416 = vand.u32 %v1410, 2147483648
      %v1417 = vsel %vm1415, %v1416, %v1414
      %v1418 = vmul.f32 %v1407, %v1408
      %v1419 = vadd.f32 %v1418, 0.0001
      %v1420 = vrsqrt.pop %v1419
      %v1421 = vmul.f32 %v1419, %v1420
      %vm1422 = vcmp.eq.f32.partialorder %v1419, inf
      %v1423 = vsel %vm1422, %v1419, %v1421
      %vm1424 = vcmp.eq.f32.partialorder %v1419, 0.0
      %v1425 = vand.u32 %v1419, 2147483648
      %v1426 = vsel %vm1424, %v1425, %v1423
      %v1427 = vsub.f32 1.0, %v1417
      %v1428 = vmax.f32 %v1427, 0.0
      %vm1429 = vcmask 1040384
      %v1430 = vsel %vm1429, %v1428, 0.0
      %1431 = vadd.xlane.f32.xlu0 %v1430
      %v1432 = vpop.xlane.xlu0 %1431
      %v1433 = vrot.slane %v1432, 4
      %v1434 = vadd.f32 %v1432, %v1433
      %v1435 = vrot.slane %v1434, 2
      %v1436 = vadd.f32 %v1434, %v1435
      %v1437 = vrot.slane %v1436, 1
      %v1438 = vadd.f32 %v1436, %v1437
      %s1439 = vtos %v1438
      %v1440 = vrcp.pop 128.0
      %s1441 = vtos %v1440
      %s1442 = smul.f32 %s1439, %s1441
      %v1443 = vrcp.pop 2.0
      %s1444 = vtos %v1443
      %s1445 = smul.f32 %s1442, %s1444
      %v1446 = vsub.f32 1.0, %v1426
      %v1447 = vmax.f32 %v1446, 0.0
      %v1448 = vsel %vm1429, %v1447, 0.0
      %1449 = vadd.xlane.f32.xlu0 %v1448
      %v1450 = vpop.xlane.xlu0 %1449
      %v1451 = vrot.slane %v1450, 4
      %v1452 = vadd.f32 %v1450, %v1451
      %v1453 = vrot.slane %v1452, 2
      %v1454 = vadd.f32 %v1452, %v1453
      %v1455 = vrot.slane %v1454, 1
      %v1456 = vadd.f32 %v1454, %v1455
      %s1457 = vtos %v1456
      %v1458 = vrcp.pop 128.0
      %s1459 = vtos %v1458
      %s1460 = smul.f32 %s1457, %s1459
      %v1461 = vrcp.pop 2.0
      %s1462 = vtos %v1461
      %s1463 = smul.f32 %s1460, %s1462
      %s1464 = sadd.f32 %s1445, %s1463
      %1465 = vxpose.xlu0.b32.start [1/16] %v1385, 128
      %1466 = vxpose.xlu0.b32.cont [2/16] 0.0, 128
      %1467 = vxpose.xlu0.b32.cont [3/16] 0.0, 128
      %1468 = vxpose.xlu0.b32.cont [4/16] 0.0, 128
      %1469 = vxpose.xlu0.b32.cont [5/16] 0.0, 128
      %1470 = vxpose.xlu0.b32.cont [6/16] 0.0, 128
      %1471 = vxpose.xlu0.b32.cont [7/16] 0.0, 128
      %1472 = vxpose.xlu0.b32.cont [8/16] 0.0, 128
      %1473 = vxpose.xlu0.b32.cont [9/16] 0.0, 128
      %1474 = vxpose.xlu0.b32.cont [10/16] 0.0, 128
      %1475 = vxpose.xlu0.b32.cont [11/16] 0.0, 128
      %1476 = vxpose.xlu0.b32.cont [12/16] 0.0, 128
      %1477 = vxpose.xlu0.b32.cont [13/16] 0.0, 128
      %1478 = vxpose.xlu0.b32.cont [14/16] 0.0, 128
      %1479 = vxpose.xlu0.b32.cont [15/16] 0.0, 128
      %1480 = vxpose.xlu0.b32.end [16/16] 0.0, 128
      %v1481 = vpop.trf.xlu0
      %v1482 = vpop.trf.xlu0
      %v1483 = vpop.trf.xlu0
      %v1484 = vpop.trf.xlu0
      %v1485 = vpop.trf.xlu0
      %v1486 = vpop.trf.xlu0
      %v1487 = vpop.trf.xlu0
      %v1488 = vpop.trf.xlu0
      %v1489 = vpop.trf.xlu0
      %v1490 = vpop.trf.xlu0
      %v1491 = vpop.trf.xlu0
      %v1492 = vpop.trf.xlu0
      %v1493 = vpop.trf.xlu0
      %v1494 = vpop.trf.xlu0
      %v1495 = vpop.trf.xlu0
      %v1496 = vpop.trf.xlu0
      %vm1497 = vcmask 64512
      %v1499 = vsel %vm1497, %v1481, 0
      %v1502 = vsel %vm1497, %v1482, 0
      %v1505 = vsel %vm1497, %v1483, 0
      %v1508 = vsel %vm1497, %v1484, 0
      %v1511 = vsel %vm1497, %v1485, 0
      %v1514 = vsel %vm1497, %v1486, 0
      %v1517 = vsel %vm1497, %v1487, 0
      %v1520 = vsel %vm1497, %v1488, 0
      %v1523 = vsel %vm1497, %v1489, 0
      %v1526 = vsel %vm1497, %v1490, 0
      %v1529 = vsel %vm1497, %v1491, 0
      %v1532 = vsel %vm1497, %v1492, 0
      %v1535 = vsel %vm1497, %v1493, 0
      %v1538 = vsel %vm1497, %v1494, 0
      %v1541 = vsel %vm1497, %v1495, 0
      %v1544 = vsel %vm1497, %v1496, 0
      %1546 = vmatprep.subr.mxu0 0.0
      %1547 = vmatpush1.msra.mxu0 %v1385
      %1548 = vmatprep.subr.mxu0 0.0
      %1549 = vmatpush1.msra.mxu0 0.0
      %1550 = vmatprep.subr.mxu0 0.0
      %1551 = vmatpush1.msra.mxu0 0.0
      %1552 = vmatprep.subr.mxu0 0.0
      %1553 = vmatpush1.msra.mxu0 0.0
      %1554 = vmatprep.subr.mxu0 0.0
      %1555 = vmatpush1.msra.mxu0 0.0
      %1556 = vmatprep.subr.mxu0 0.0
      %1557 = vmatpush1.msra.mxu0 0.0
      %1558 = vmatprep.subr.mxu0 0.0
      %1559 = vmatpush1.msra.mxu0 0.0
      %1560 = vmatprep.subr.mxu0 0.0
      %1561 = vmatpush1.msra.mxu0 0.0
      %1562 = vmatprep.subr.mxu0 0.0
      %1563 = vmatpush1.msra.mxu0 0.0
      %1564 = vmatprep.subr.mxu0 0.0
      %1565 = vmatpush1.msra.mxu0 0.0
      %1566 = vmatprep.subr.mxu0 0.0
      %1567 = vmatpush1.msra.mxu0 0.0
      %1568 = vmatprep.subr.mxu0 0.0
      %1569 = vmatpush1.msra.mxu0 0.0
      %1570 = vmatprep.subr.mxu0 0.0
      %1571 = vmatpush1.msra.mxu0 0.0
      %1572 = vmatprep.subr.mxu0 0.0
      %1573 = vmatpush1.msra.mxu0 0.0
      %1574 = vmatprep.subr.mxu0 0.0
      %1575 = vmatpush1.msra.mxu0 0.0
      %1576 = vmatprep.subr.mxu0 0.0
      %1577 = vmatpush1.msra.mxu0 0.0
      %1578 = vmatprep.subr.mxu0 0.0
      %1579 = vmatpush1.msra.mxu0 0.0
      %1580 = vmatprep.subr.mxu0 0.0
      %1581 = vmatpush1.msra.mxu0 0.0
      %1582 = vmatprep.subr.mxu0 0.0
      %1583 = vmatpush1.msra.mxu0 0.0
      %1584 = vmatprep.subr.mxu0 0.0
      %1585 = vmatpush1.msra.mxu0 0.0
      %1586 = vmatprep.subr.mxu0 0.0
      %1587 = vmatpush1.msra.mxu0 0.0
      %1588 = vmatprep.subr.mxu0 0.0
      %1589 = vmatpush1.msra.mxu0 0.0
      %1590 = vmatprep.subr.mxu0 0.0
      %1591 = vmatpush1.msra.mxu0 0.0
      %1592 = vmatprep.subr.mxu0 0.0
      %1593 = vmatpush1.msra.mxu0 0.0
      %1594 = vmatprep.subr.mxu0 0.0
      %1595 = vmatpush1.msra.mxu0 0.0
      %1596 = vmatprep.subr.mxu0 0.0
      %1597 = vmatpush1.msra.mxu0 0.0
      %1598 = vmatprep.subr.mxu0 0.0
      %1599 = vmatpush1.msra.mxu0 0.0
      %1600 = vmatprep.subr.mxu0 0.0
      %1601 = vmatpush1.msra.mxu0 0.0
      %1602 = vmatprep.subr.mxu0 0.0
      %1603 = vmatpush1.msra.mxu0 0.0
      %1604 = vmatprep.subr.mxu0 0.0
      %1605 = vmatpush1.msra.mxu0 0.0
      %1606 = vmatprep.subr.mxu0 0.0
      %1607 = vmatpush1.msra.mxu0 0.0
      %1608 = vmatprep.subr.mxu0 0.0
      %1609 = vmatpush1.msra.mxu0 0.0
      %1610 = vmatprep.mubr.f32.mxu0 0.0
      %1611 = vmatmul.mubr.f32.gmra.mrb[0].mxu0 %v1499
      %v1612 = vpop.f32.mrb[0].mxu0
      %v1613 = vadd.f32 0.0, %v1612
      %v1614 = vpop.f32.mrb[0].mxu0
      %1615 = vmatprep.mubr.f32.mxu0 0.0
      %1616 = vmatmul.mubr.f32.gmra.mrb[0].mxu0 %v1502
      %v1617 = vpop.f32.mrb[0].mxu0
      %v1618 = vadd.f32 0.0, %v1617
      %v1619 = vpop.f32.mrb[0].mxu0
      %1620 = vmatprep.mubr.f32.mxu0 0.0
      %1621 = vmatmul.mubr.f32.gmra.mrb[0].mxu0 %v1505
      %v1622 = vpop.f32.mrb[0].mxu0
      %v1623 = vadd.f32 0.0, %v1622
      %v1624 = vpop.f32.mrb[0].mxu0
      %1625 = vmatprep.mubr.f32.mxu0 0.0
      %1626 = vmatmul.mubr.f32.gmra.mrb[0].mxu0 %v1508
      %v1627 = vpop.f32.mrb[0].mxu0
      %v1628 = vadd.f32 0.0, %v1627
      %v1629 = vpop.f32.mrb[0].mxu0
      %1630 = vmatprep.mubr.f32.mxu0 0.0
      %1631 = vmatmul.mubr.f32.gmra.mrb[0].mxu0 %v1511
      %v1632 = vpop.f32.mrb[0].mxu0
      %v1633 = vadd.f32 0.0, %v1632
      %v1634 = vpop.f32.mrb[0].mxu0
      %1635 = vmatprep.mubr.f32.mxu0 0.0
      %1636 = vmatmul.mubr.f32.gmra.mrb[0].mxu0 %v1514
      %v1637 = vpop.f32.mrb[0].mxu0
      %v1638 = vadd.f32 0.0, %v1637
      %v1639 = vpop.f32.mrb[0].mxu0
      %1640 = vmatprep.mubr.f32.mxu0 0.0
      %1641 = vmatmul.mubr.f32.gmra.mrb[0].mxu0 %v1517
      %v1642 = vpop.f32.mrb[0].mxu0
      %v1643 = vadd.f32 0.0, %v1642
      %v1644 = vpop.f32.mrb[0].mxu0
      %1645 = vmatprep.mubr.f32.mxu0 0.0
      %1646 = vmatmul.mubr.f32.gmra.mrb[0].mxu0 %v1520
      %v1647 = vpop.f32.mrb[0].mxu0
      %v1648 = vadd.f32 0.0, %v1647
      %v1649 = vpop.f32.mrb[0].mxu0
      %1650 = vmatprep.mubr.f32.mxu0 0.0
      %1651 = vmatmul.mubr.f32.gmra.mrb[0].mxu0 %v1523
      %v1652 = vpop.f32.mrb[0].mxu0
      %v1653 = vadd.f32 0.0, %v1652
      %v1654 = vpop.f32.mrb[0].mxu0
      %1655 = vmatprep.mubr.f32.mxu0 0.0
      %1656 = vmatmul.mubr.f32.gmra.mrb[0].mxu0 %v1526
      %v1657 = vpop.f32.mrb[0].mxu0
      %v1658 = vadd.f32 0.0, %v1657
      %v1659 = vpop.f32.mrb[0].mxu0
      %1660 = vmatprep.mubr.f32.mxu0 0.0
      %1661 = vmatmul.mubr.f32.gmra.mrb[0].mxu0 %v1529
      %v1662 = vpop.f32.mrb[0].mxu0
      %v1663 = vadd.f32 0.0, %v1662
      %v1664 = vpop.f32.mrb[0].mxu0
      %1665 = vmatprep.mubr.f32.mxu0 0.0
      %1666 = vmatmul.mubr.f32.gmra.mrb[0].mxu0 %v1532
      %v1667 = vpop.f32.mrb[0].mxu0
      %v1668 = vadd.f32 0.0, %v1667
      %v1669 = vpop.f32.mrb[0].mxu0
      %1670 = vmatprep.mubr.f32.mxu0 0.0
      %1671 = vmatmul.mubr.f32.gmra.mrb[0].mxu0 %v1535
      %v1672 = vpop.f32.mrb[0].mxu0
      %v1673 = vadd.f32 0.0, %v1672
      %v1674 = vpop.f32.mrb[0].mxu0
      %1675 = vmatprep.mubr.f32.mxu0 0.0
      %1676 = vmatmul.mubr.f32.gmra.mrb[0].mxu0 %v1538
      %v1677 = vpop.f32.mrb[0].mxu0
      %v1678 = vadd.f32 0.0, %v1677
      %v1679 = vpop.f32.mrb[0].mxu0
      %1680 = vmatprep.mubr.f32.mxu0 0.0
      %1681 = vmatmul.mubr.f32.gmra.mrb[0].mxu0 %v1541
      %v1682 = vpop.f32.mrb[0].mxu0
      %v1683 = vadd.f32 0.0, %v1682
      %v1684 = vpop.f32.mrb[0].mxu0
      %1685 = vmatprep.mubr.f32.mxu0 0.0
      %1686 = vmatmul.mubr.f32.gmra.mrb[0].mxu0 %v1544
      %v1687 = vpop.f32.mrb[0].mxu0
      %v1688 = vadd.f32 0.0, %v1687
      %v1689 = vpop.f32.mrb[0].mxu0
      %1690 = vdwg.mxu0
      %1691 = vxpose.xlu0.b32.start [1/16] %v1393, 128
      %1692 = vxpose.xlu0.b32.cont [2/16] 0.0, 128
      %1693 = vxpose.xlu0.b32.cont [3/16] 0.0, 128
      %1694 = vxpose.xlu0.b32.cont [4/16] 0.0, 128
      %1695 = vxpose.xlu0.b32.cont [5/16] 0.0, 128
      %1696 = vxpose.xlu0.b32.cont [6/16] 0.0, 128
      %1697 = vxpose.xlu0.b32.cont [7/16] 0.0, 128
      %1698 = vxpose.xlu0.b32.cont [8/16] 0.0, 128
      %1699 = vxpose.xlu0.b32.cont [9/16] 0.0, 128
      %1700 = vxpose.xlu0.b32.cont [10/16] 0.0, 128
      %1701 = vxpose.xlu0.b32.cont [11/16] 0.0, 128
      %1702 = vxpose.xlu0.b32.cont [12/16] 0.0, 128
      %1703 = vxpose.xlu0.b32.cont [13/16] 0.0, 128
      %1704 = vxpose.xlu0.b32.cont [14/16] 0.0, 128
      %1705 = vxpose.xlu0.b32.cont [15/16] 0.0, 128
      %1706 = vxpose.xlu0.b32.end [16/16] 0.0, 128
      %v1707 = vpop.trf.xlu0
      %v1708 = vpop.trf.xlu0
      %v1709 = vpop.trf.xlu0
      %v1710 = vpop.trf.xlu0
      %v1711 = vpop.trf.xlu0
      %v1712 = vpop.trf.xlu0
      %v1713 = vpop.trf.xlu0
      %v1714 = vpop.trf.xlu0
      %v1715 = vpop.trf.xlu0
      %v1716 = vpop.trf.xlu0
      %v1717 = vpop.trf.xlu0
      %v1718 = vpop.trf.xlu0
      %v1719 = vpop.trf.xlu0
      %v1720 = vpop.trf.xlu0
      %v1721 = vpop.trf.xlu0
      %v1722 = vpop.trf.xlu0
      %v1724 = vsel %vm1497, %v1707, 0
      %v1727 = vsel %vm1497, %v1708, 0
      %v1730 = vsel %vm1497, %v1709, 0
      %v1733 = vsel %vm1497, %v1710, 0
      %v1736 = vsel %vm1497, %v1711, 0
      %v1739 = vsel %vm1497, %v1712, 0
      %v1742 = vsel %vm1497, %v1713, 0
      %v1745 = vsel %vm1497, %v1714, 0
      %v1748 = vsel %vm1497, %v1715, 0
      %v1751 = vsel %vm1497, %v1716, 0
      %v1754 = vsel %vm1497, %v1717, 0
      %v1757 = vsel %vm1497, %v1718, 0
      %v1760 = vsel %vm1497, %v1719, 0
      %v1763 = vsel %vm1497, %v1720, 0
      %v1766 = vsel %vm1497, %v1721, 0
      %v1769 = vsel %vm1497, %v1722, 0
      %1771 = vmatprep.subr.mxu0 0.0
      %1772 = vmatpush1.msra.mxu0 %v1393
      %1773 = vmatprep.subr.mxu0 0.0
      %1774 = vmatpush1.msra.mxu0 0.0
      %1775 = vmatprep.subr.mxu0 0.0
      %1776 = vmatpush1.msra.mxu0 0.0
      %1777 = vmatprep.subr.mxu0 0.0
      %1778 = vmatpush1.msra.mxu0 0.0
      %1779 = vmatprep.subr.mxu0 0.0
      %1780 = vmatpush1.msra.mxu0 0.0
      %1781 = vmatprep.subr.mxu0 0.0
      %1782 = vmatpush1.msra.mxu0 0.0
      %1783 = vmatprep.subr.mxu0 0.0
      %1784 = vmatpush1.msra.mxu0 0.0
      %1785 = vmatprep.subr.mxu0 0.0
      %1786 = vmatpush1.msra.mxu0 0.0
      %1787 = vmatprep.subr.mxu0 0.0
      %1788 = vmatpush1.msra.mxu0 0.0
      %1789 = vmatprep.subr.mxu0 0.0
      %1790 = vmatpush1.msra.mxu0 0.0
      %1791 = vmatprep.subr.mxu0 0.0
      %1792 = vmatpush1.msra.mxu0 0.0
      %1793 = vmatprep.subr.mxu0 0.0
      %1794 = vmatpush1.msra.mxu0 0.0
      %1795 = vmatprep.subr.mxu0 0.0
      %1796 = vmatpush1.msra.mxu0 0.0
      %1797 = vmatprep.subr.mxu0 0.0
      %1798 = vmatpush1.msra.mxu0 0.0
      %1799 = vmatprep.subr.mxu0 0.0
      %1800 = vmatpush1.msra.mxu0 0.0
      %1801 = vmatprep.subr.mxu0 0.0
      %1802 = vmatpush1.msra.mxu0 0.0
      %1803 = vmatprep.subr.mxu0 0.0
      %1804 = vmatpush1.msra.mxu0 0.0
      %1805 = vmatprep.subr.mxu0 0.0
      %1806 = vmatpush1.msra.mxu0 0.0
      %1807 = vmatprep.subr.mxu0 0.0
      %1808 = vmatpush1.msra.mxu0 0.0
      %1809 = vmatprep.subr.mxu0 0.0
      %1810 = vmatpush1.msra.mxu0 0.0
      %1811 = vmatprep.subr.mxu0 0.0
      %1812 = vmatpush1.msra.mxu0 0.0
      %1813 = vmatprep.subr.mxu0 0.0
      %1814 = vmatpush1.msra.mxu0 0.0
      %1815 = vmatprep.subr.mxu0 0.0
      %1816 = vmatpush1.msra.mxu0 0.0
      %1817 = vmatprep.subr.mxu0 0.0
      %1818 = vmatpush1.msra.mxu0 0.0
      %1819 = vmatprep.subr.mxu0 0.0
      %1820 = vmatpush1.msra.mxu0 0.0
      %1821 = vmatprep.subr.mxu0 0.0
      %1822 = vmatpush1.msra.mxu0 0.0
      %1823 = vmatprep.subr.mxu0 0.0
      %1824 = vmatpush1.msra.mxu0 0.0
      %1825 = vmatprep.subr.mxu0 0.0
      %1826 = vmatpush1.msra.mxu0 0.0
      %1827 = vmatprep.subr.mxu0 0.0
      %1828 = vmatpush1.msra.mxu0 0.0
      %1829 = vmatprep.subr.mxu0 0.0
      %1830 = vmatpush1.msra.mxu0 0.0
      %1831 = vmatprep.subr.mxu0 0.0
      %1832 = vmatpush1.msra.mxu0 0.0
      %1833 = vmatprep.subr.mxu0 0.0
      %1834 = vmatpush1.msra.mxu0 0.0
      %1835 = vmatprep.mubr.f32.mxu0 0.0
      %1836 = vmatmul.mubr.f32.gmra.mrb[0].mxu0 %v1724
      %v1837 = vpop.f32.mrb[0].mxu0
      %v1838 = vadd.f32 0.0, %v1837
      %v1839 = vpop.f32.mrb[0].mxu0
      %1840 = vmatprep.mubr.f32.mxu0 0.0
      %1841 = vmatmul.mubr.f32.gmra.mrb[0].mxu0 %v1727
      %v1842 = vpop.f32.mrb[0].mxu0
      %v1843 = vadd.f32 0.0, %v1842
      %v1844 = vpop.f32.mrb[0].mxu0
      %1845 = vmatprep.mubr.f32.mxu0 0.0
      %1846 = vmatmul.mubr.f32.gmra.mrb[0].mxu0 %v1730
      %v1847 = vpop.f32.mrb[0].mxu0
      %v1848 = vadd.f32 0.0, %v1847
      %v1849 = vpop.f32.mrb[0].mxu0
      %1850 = vmatprep.mubr.f32.mxu0 0.0
      %1851 = vmatmul.mubr.f32.gmra.mrb[0].mxu0 %v1733
      %v1852 = vpop.f32.mrb[0].mxu0
      %v1853 = vadd.f32 0.0, %v1852
      %v1854 = vpop.f32.mrb[0].mxu0
      %1855 = vmatprep.mubr.f32.mxu0 0.0
      %1856 = vmatmul.mubr.f32.gmra.mrb[0].mxu0 %v1736
      %v1857 = vpop.f32.mrb[0].mxu0
      %v1858 = vadd.f32 0.0, %v1857
      %v1859 = vpop.f32.mrb[0].mxu0
      %1860 = vmatprep.mubr.f32.mxu0 0.0
      %1861 = vmatmul.mubr.f32.gmra.mrb[0].mxu0 %v1739
      %v1862 = vpop.f32.mrb[0].mxu0
      %v1863 = vadd.f32 0.0, %v1862
      %v1864 = vpop.f32.mrb[0].mxu0
      %1865 = vmatprep.mubr.f32.mxu0 0.0
      %1866 = vmatmul.mubr.f32.gmra.mrb[0].mxu0 %v1742
      %v1867 = vpop.f32.mrb[0].mxu0
      %v1868 = vadd.f32 0.0, %v1867
      %v1869 = vpop.f32.mrb[0].mxu0
      %1870 = vmatprep.mubr.f32.mxu0 0.0
      %1871 = vmatmul.mubr.f32.gmra.mrb[0].mxu0 %v1745
      %v1872 = vpop.f32.mrb[0].mxu0
      %v1873 = vadd.f32 0.0, %v1872
      %v1874 = vpop.f32.mrb[0].mxu0
      %1875 = vmatprep.mubr.f32.mxu0 0.0
      %1876 = vmatmul.mubr.f32.gmra.mrb[0].mxu0 %v1748
      %v1877 = vpop.f32.mrb[0].mxu0
      %v1878 = vadd.f32 0.0, %v1877
      %v1879 = vpop.f32.mrb[0].mxu0
      %1880 = vmatprep.mubr.f32.mxu0 0.0
      %1881 = vmatmul.mubr.f32.gmra.mrb[0].mxu0 %v1751
      %v1882 = vpop.f32.mrb[0].mxu0
      %v1883 = vadd.f32 0.0, %v1882
      %v1884 = vpop.f32.mrb[0].mxu0
      %1885 = vmatprep.mubr.f32.mxu0 0.0
      %1886 = vmatmul.mubr.f32.gmra.mrb[0].mxu0 %v1754
      %v1887 = vpop.f32.mrb[0].mxu0
      %v1888 = vadd.f32 0.0, %v1887
      %v1889 = vpop.f32.mrb[0].mxu0
      %1890 = vmatprep.mubr.f32.mxu0 0.0
      %1891 = vmatmul.mubr.f32.gmra.mrb[0].mxu0 %v1757
      %v1892 = vpop.f32.mrb[0].mxu0
      %v1893 = vadd.f32 0.0, %v1892
      %v1894 = vpop.f32.mrb[0].mxu0
      %1895 = vmatprep.mubr.f32.mxu0 0.0
      %1896 = vmatmul.mubr.f32.gmra.mrb[0].mxu0 %v1760
      %v1897 = vpop.f32.mrb[0].mxu0
      %v1898 = vadd.f32 0.0, %v1897
      %v1899 = vpop.f32.mrb[0].mxu0
      %1900 = vmatprep.mubr.f32.mxu0 0.0
      %1901 = vmatmul.mubr.f32.gmra.mrb[0].mxu0 %v1763
      %v1902 = vpop.f32.mrb[0].mxu0
      %v1903 = vadd.f32 0.0, %v1902
      %v1904 = vpop.f32.mrb[0].mxu0
      %1905 = vmatprep.mubr.f32.mxu0 0.0
      %1906 = vmatmul.mubr.f32.gmra.mrb[0].mxu0 %v1766
      %v1907 = vpop.f32.mrb[0].mxu0
      %v1908 = vadd.f32 0.0, %v1907
      %v1909 = vpop.f32.mrb[0].mxu0
      %1910 = vmatprep.mubr.f32.mxu0 0.0
      %1911 = vmatmul.mubr.f32.gmra.mrb[0].mxu0 %v1769
      %v1912 = vpop.f32.mrb[0].mxu0
      %v1913 = vadd.f32 0.0, %v1912
      %v1914 = vpop.f32.mrb[0].mxu0
      %1915 = vdwg.mxu0
      %v1916 = vmul.f32 %v1613, %v1408
      %v1917 = vmul.f32 %v1618, %v1408
      %v1918 = vmul.f32 %v1623, %v1408
      %v1919 = vmul.f32 %v1628, %v1408
      %v1920 = vmul.f32 %v1633, %v1408
      %v1921 = vmul.f32 %v1638, %v1408
      %v1922 = vmul.f32 %v1643, %v1408
      %v1923 = vmul.f32 %v1648, %v1408
      %v1924 = vmul.f32 %v1653, %v1408
      %v1925 = vmul.f32 %v1658, %v1408
      %v1926 = vmul.f32 %v1663, %v1408
      %v1927 = vmul.f32 %v1668, %v1408
      %v1928 = vmul.f32 %v1673, %v1408
      %v1929 = vmul.f32 %v1678, %v1408
      %v1930 = vmul.f32 %v1683, %v1408
      %v1931 = vmul.f32 %v1688, %v1408
      %v1932 = vmul.f32 %v1838, %v1408
      %v1933 = vmul.f32 %v1843, %v1408
      %v1934 = vmul.f32 %v1848, %v1408
      %v1935 = vmul.f32 %v1853, %v1408
      %v1936 = vmul.f32 %v1858, %v1408
      %v1937 = vmul.f32 %v1863, %v1408
      %v1938 = vmul.f32 %v1868, %v1408
      %v1939 = vmul.f32 %v1873, %v1408
      %v1940 = vmul.f32 %v1878, %v1408
      %v1941 = vmul.f32 %v1883, %v1408
      %v1942 = vmul.f32 %v1888, %v1408
      %v1943 = vmul.f32 %v1893, %v1408
      %v1944 = vmul.f32 %v1898, %v1408
      %v1945 = vmul.f32 %v1903, %v1408
      %v1946 = vmul.f32 %v1908, %v1408
      %v1947 = vmul.f32 %v1913, %v1408
      %v1948 = vmul.f32 %v1916, %v1916
      %v1949 = vmul.f32 %v1917, %v1917
      %v1950 = vmul.f32 %v1918, %v1918
      %v1951 = vmul.f32 %v1919, %v1919
      %v1952 = vmul.f32 %v1920, %v1920
      %v1953 = vmul.f32 %v1921, %v1921
      %v1954 = vmul.f32 %v1922, %v1922
      %v1955 = vmul.f32 %v1923, %v1923
      %v1956 = vmul.f32 %v1924, %v1924
      %v1957 = vmul.f32 %v1925, %v1925
      %v1958 = vmul.f32 %v1926, %v1926
      %v1959 = vmul.f32 %v1927, %v1927
      %v1960 = vmul.f32 %v1928, %v1928
      %v1961 = vmul.f32 %v1929, %v1929
      %v1962 = vmul.f32 %v1930, %v1930
      %v1963 = vmul.f32 %v1931, %v1931
      %v1964 = vadd.f32 %v1948, %v1949
      %v1965 = vadd.f32 %v1964, %v1950
      %v1966 = vadd.f32 %v1965, %v1951
      %v1967 = vadd.f32 %v1966, %v1952
      %v1968 = vadd.f32 %v1967, %v1953
      %v1969 = vadd.f32 %v1968, %v1954
      %v1970 = vadd.f32 %v1969, %v1955
      %v1971 = vadd.f32 %v1970, %v1956
      %v1972 = vadd.f32 %v1971, %v1957
      %v1973 = vadd.f32 %v1972, %v1958
      %v1974 = vadd.f32 %v1973, %v1959
      %v1975 = vadd.f32 %v1974, %v1960
      %v1976 = vadd.f32 %v1975, %v1961
      %v1977 = vadd.f32 %v1976, %v1962
      %v1978 = vadd.f32 %v1977, %v1963
      %1979 = vadd.xlane.f32.xlu0 %v1978
      %v1980 = vpop.xlane.xlu0 %1979
      %v1981 = vrot.slane %v1980, 4
      %v1982 = vadd.f32 %v1980, %v1981
      %v1983 = vrot.slane %v1982, 2
      %v1984 = vadd.f32 %v1982, %v1983
      %v1985 = vrot.slane %v1984, 1
      %v1986 = vadd.f32 %v1984, %v1985
      %s1987 = vtos %v1986
      %v1988 = vmul.f32 %v1409, %v1409
      %v1989 = vsel %vm1429, %v1988, 0.0
      %1990 = vadd.xlane.f32.xlu0 %v1989
      %v1991 = vpop.xlane.xlu0 %1990
      %v1992 = vrot.slane %v1991, 4
      %v1993 = vadd.f32 %v1991, %v1992
      %v1994 = vrot.slane %v1993, 2
      %v1995 = vadd.f32 %v1993, %v1994
      %v1996 = vrot.slane %v1995, 1
      %v1997 = vadd.f32 %v1995, %v1996
      %s1998 = vtos %v1997
      %s1999 = ssub.f32 %s1987, %s1998
      %v2000 = vrcp.pop 128.0
      %s2001 = vtos %v2000
      %s2002 = smul.f32 %s1999, %s2001
      %v2003 = vmul.f32 %v1932, %v1932
      %v2004 = vmul.f32 %v1933, %v1933
      %v2005 = vmul.f32 %v1934, %v1934
      %v2006 = vmul.f32 %v1935, %v1935
      %v2007 = vmul.f32 %v1936, %v1936
      %v2008 = vmul.f32 %v1937, %v1937
      %v2009 = vmul.f32 %v1938, %v1938
      %v2010 = vmul.f32 %v1939, %v1939
      %v2011 = vmul.f32 %v1940, %v1940
      %v2012 = vmul.f32 %v1941, %v1941
      %v2013 = vmul.f32 %v1942, %v1942
      %v2014 = vmul.f32 %v1943, %v1943
      %v2015 = vmul.f32 %v1944, %v1944
      %v2016 = vmul.f32 %v1945, %v1945
      %v2017 = vmul.f32 %v1946, %v1946
      %v2018 = vmul.f32 %v1947, %v1947
      %v2019 = vadd.f32 %v2003, %v2004
      %v2020 = vadd.f32 %v2019, %v2005
      %v2021 = vadd.f32 %v2020, %v2006
      %v2022 = vadd.f32 %v2021, %v2007
      %v2023 = vadd.f32 %v2022, %v2008
      %v2024 = vadd.f32 %v2023, %v2009
      %v2025 = vadd.f32 %v2024, %v2010
      %v2026 = vadd.f32 %v2025, %v2011
      %v2027 = vadd.f32 %v2026, %v2012
      %v2028 = vadd.f32 %v2027, %v2013
      %v2029 = vadd.f32 %v2028, %v2014
      %v2030 = vadd.f32 %v2029, %v2015
      %v2031 = vadd.f32 %v2030, %v2016
      %v2032 = vadd.f32 %v2031, %v2017
      %v2033 = vadd.f32 %v2032, %v2018
      %2034 = vadd.xlane.f32.xlu0 %v2033
      %v2035 = vpop.xlane.xlu0 %2034
      %v2036 = vrot.slane %v2035, 4
      %v2037 = vadd.f32 %v2035, %v2036
      %v2038 = vrot.slane %v2037, 2
      %v2039 = vadd.f32 %v2037, %v2038
      %v2040 = vrot.slane %v2039, 1
      %v2041 = vadd.f32 %v2039, %v2040
      %s2042 = vtos %v2041
      %v2043 = vmul.f32 %v1418, %v1418
      %v2044 = vsel %vm1429, %v2043, 0.0
      %2045 = vadd.xlane.f32.xlu0 %v2044
      %v2046 = vpop.xlane.xlu0 %2045
      %v2047 = vrot.slane %v2046, 4
      %v2048 = vadd.f32 %v2046, %v2047
      %v2049 = vrot.slane %v2048, 2
      %v2050 = vadd.f32 %v2048, %v2049
      %v2051 = vrot.slane %v2050, 1
      %v2052 = vadd.f32 %v2050, %v2051
      %s2053 = vtos %v2052
      %s2054 = ssub.f32 %s2042, %s2053
      %v2055 = vrcp.pop 128.0
      %s2056 = vtos %v2055
      %s2057 = smul.f32 %s2054, %s2056
      %s2058 = sadd.f32 %s2002, %s2057
      %s2059 = smul.f32 %s1377, 25.0
      %s2060 = smul.f32 %s1464, 25.0
      %s2061 = sadd.f32 %s2059, %s2060
      %s2062 = sadd.f32 %s2061, %s2058
      %s2063 = scalar_lea.smem [#allocation3], 0
      %2064 = sst [smem:[%s2063]] %s2062
    $region57: #{vicreg_forward.1} parent=1 // pred_fallthru
      _
    // Predicated region
    $region58: #{vicreg_forward.1} parent=1 // pred_check
      _
    $region59: #{vicreg_forward.1} parent=1 // pred_check_branch
      %2066 = sbr.rel (0) target = $region61
    $region60: #{vicreg_forward.1} parent=1 // pred_region
      %s2068 = ssub.s32 16, 16
      %2069 = vsyncadd [#allocation4], %s2068
      %2072 = dma.smem_to_hbm [#allocation3], 16, %s12, [#allocation4]
    $region61: #{vicreg_forward.1} parent=1 // pred_fallthru
      _
    // Predicated region
    $region62: #{vicreg_forward.1} parent=1 // pred_check
      _
    $region63: #{vicreg_forward.1} parent=1 // pred_check_branch
      %2074 = sbr.rel (0) target = $region65
    $region64: #{vicreg_forward.1} parent=1 // pred_region
      %2075 = dma.done [#allocation4], 16
    $region65: #{vicreg_forward.1} parent=1 // pred_fallthru
      _
    %2076 = sfence
    %2077 = vsyncpa [#allocation4], 1

</llo_original>
